<compile_context>
chip_gen: v6e
topology: v6e:2x2x1
jax: 0.10.0
libtpu: 0.0.40
codegen_flags: <defaults>
</compile_context>

<pallas_src>
import functools

import jax
import jax.numpy as jnp
import numpy as np
from jax import lax
from jax.experimental import pallas as pl
from jax.experimental.pallas import tpu as pltpu

KSIZE = 7            # SpatialAttention kernel_size
PAD = KSIZE // 2     # padding = kernel_size // 2
NTAPS = KSIZE * KSIZE


def _conv_tap_tables(H, W):
    """Static per-tap flat shifts and zero-padding masks for the 7x7 'same' conv."""
    HW = H * W
    masks = np.zeros((NTAPS, HW), np.float32)
    shifts = []
    for dy in range(KSIZE):
        for dx in range(KSIZE):
            t = dy * KSIZE + dx
            m = np.zeros((H, W), np.float32)
            m[max(0, PAD - dy):min(H, H + PAD - dy),
              max(0, PAD - dx):min(W, W + PAD - dx)] = 1.0
            masks[t] = m.reshape(-1)
            shifts.append((dy - PAD) * W + (dx - PAD))
    return masks, tuple(shifts)


def _cbam_kernel(x_ref, w1_ref, b1_ref, w2_ref, b2_ref, coeff_ref, bsp_ref,
                 o_ref, *, shifts):
    C, HW = x_ref.shape
    x = x_ref[...]                                            # (C, HW) lane-dense f32

    # ---------------- Channel attention ----------------
    avg_p = jnp.sum(x, axis=1, keepdims=True) * (1.0 / HW)    # (C, 1)
    max_p = jnp.max(x, axis=1, keepdims=True)                 # (C, 1)
    # Fused (C, 2) pooled matrix: col 0 = avg, col 1 = max.  iota+where keeps
    # this a plain VPU select (avoids an unaligned 1-lane concat; cost ~2 ops).
    col = lax.broadcasted_iota(jnp.int32, (C, 2), 1)
    pools = jnp.where(col == 0, avg_p, max_p)                 # (C, 2)

    # Single-pass bf16 MXU path for the two tiny 1x1-conv dots (perf review:
    # drop HIGHEST).  The JAX reference applies the same bf16 casts.
    h = jnp.dot(w1_ref[...].astype(jnp.bfloat16), pools.astype(jnp.bfloat16),
                preferred_element_type=jnp.float32) + b1_ref[...]       # (Ch, 2)
    h = jnp.maximum(h, 0.0)
    att = jnp.dot(w2_ref[...].astype(jnp.bfloat16), h.astype(jnp.bfloat16),
                  preferred_element_type=jnp.float32) + b2_ref[...]     # (C, 2)
    ca = jax.nn.sigmoid(att[:, 0:1] + att[:, 1:2])            # (C, 1)

    # Stage x*ca through o_ref: removes the slab-sized x_ca temp (v7x VMEM).
    o_ref[...] = (x * ca).astype(o_ref.dtype)
    x_ca = o_ref[...].astype(jnp.float32)

    # ---------------- Spatial attention ----------------
    avg_sp = jnp.mean(x_ca, axis=0, keepdims=True)            # (1, HW)
    max_sp = jnp.max(x_ca, axis=0, keepdims=True)             # (1, HW)
    packed = jnp.concatenate([avg_sp, max_sp], axis=1)        # (1, 2*HW), aligned concat

    # 7x7 "same" cross-correlation: per tap one lane roll of the packed avg|max
    # map + one multiply-add with the precomputed (mask * weight) row.  The
    # zero-padding mask kills cross-row / wrap-around contamination, so one
    # roll covers both channels.
    two_hw = 2 * HW
    acc = jnp.zeros((1, two_hw), jnp.float32)
    for t, s in enumerate(shifts):
        shift = (-s) % two_hw
        shifted = packed if shift == 0 else pltpu.roll(packed, shift=shift, axis=1)
        acc = acc + coeff_ref[t:t + 1, :] * shifted
    conv = acc[:, :HW] + acc[:, HW:] + bsp_ref[0]             # (1, HW)
    sa = jax.nn.sigmoid(conv)

    # Final: one dense broadcast multiply + one unmasked (C, HW) store.
    o_ref[...] = (o_ref[...] * sa).astype(o_ref.dtype)


def cbam_forward(x, w1, b1, w2, b2, wsp_flat, bsp):
    B, C, H, W = x.shape
    Ch = w1.shape[0]
    HW = H * W
    x_flat = x.reshape(B, C, HW)          # lane-dense layout for the kernel

    masks, shifts = _conv_tap_tables(H, W)
    # Per-tap coefficient rows (built once per call, outside the grid loop):
    # avg-channel taps scale lanes [0, HW), max-channel taps scale [HW, 2*HW);
    # the zero-padding mask is folded in.
    w_pair = jnp.concatenate(
        [jnp.broadcast_to(wsp_flat[:NTAPS, None], (NTAPS, HW)),
         jnp.broadcast_to(wsp_flat[NTAPS:, None], (NTAPS, HW))], axis=1)
    coeff = (jnp.asarray(np.concatenate([masks, masks], axis=1)) *
             w_pair).astype(jnp.float32)                      # (NTAPS, 2*HW)

    slab_bytes = C * HW * 4
    vmem_limit = int(min(96 * 2 ** 20,
                         max(32 * 2 ** 20,
                             4 * slab_bytes + coeff.size * 4 + (2 << 20))))

    kernel = functools.partial(_cbam_kernel, shifts=shifts)
    out_flat = pl.pallas_call(
        kernel,
        out_shape=jax.ShapeDtypeStruct((B, C, HW), x.dtype),
        grid_spec=pltpu.PrefetchScalarGridSpec(
            num_scalar_prefetch=0,
            grid=(B,),
            in_specs=[
                pl.BlockSpec((None, C, HW), lambda b: (b, 0, 0)),   # x slab (batch squeezed)
                pl.BlockSpec((Ch, C), lambda b: (0, 0)),            # fc1 weight
                pl.BlockSpec((Ch, 1), lambda b: (0, 0)),            # fc1 bias
                pl.BlockSpec((C, Ch), lambda b: (0, 0)),            # fc2 weight
                pl.BlockSpec((C, 1), lambda b: (0, 0)),             # fc2 bias
                pl.BlockSpec((NTAPS, 2 * HW), lambda b: (0, 0)),    # conv tap coefficients
                pl.BlockSpec(memory_space=pltpu.MemorySpace.SMEM),  # conv bias (1,)
            ],
            out_specs=pl.BlockSpec((None, C, HW), lambda b: (b, 0, 0)),
        ),
        compiler_params=pltpu.CompilerParams(
            dimension_semantics=("parallel",),   # batch across TCs (v7x 2-TC)
            vmem_limit_bytes=vmem_limit,
        ),
    )(x_flat, w1, b1, w2, b2, coeff, bsp)
    return out_flat.reshape(B, C, H, W)


def cbam_ref(x, w1, b1, w2, b2, wsp_flat, bsp):
    # Pure-JAX reference mirroring the PyTorch module.  The MLP uses the same
    # explicit bf16-input / f32-accumulate matmul path as the kernel so the
    # check isolates kernel bugs (restore Precision.HIGHEST everywhere for
    # exact-f32 parity with PyTorch).
    def mlp(p):                                   # p: (B, C)
        h = jnp.dot(p.astype(jnp.bfloat16), w1.astype(jnp.bfloat16).T,
                    preferred_element_type=jnp.float32) + b1[:, 0]
        h = jnp.maximum(h, 0.0)
        return jnp.dot(h.astype(jnp.bfloat16), w2.astype(jnp.bfloat16).T,
                       preferred_element_type=jnp.float32) + b2[:, 0]

    avg = jnp.mean(x, axis=(2, 3))
    mx = jnp.max(x, axis=(2, 3))
    ca = jax.nn.sigmoid(mlp(avg) + mlp(mx))       # (B, C)
    x_ca = x * ca[:, :, None, None]

    avg_sp = jnp.mean(x_ca, axis=1, keepdims=True)
    max_sp = jnp.max(x_ca, axis=1, keepdims=True)
    cat = jnp.concatenate([avg_sp, max_sp], axis=1)            # (B, 2, H, W)
    conv = lax.conv_general_dilated(
        cat, wsp_flat.reshape(1, 2, KSIZE, KSIZE),
        window_strides=(1, 1), padding=((PAD, PAD), (PAD, PAD)),
        dimension_numbers=("NCHW", "OIHW", "NCHW"),
        precision=lax.Precision.HIGHEST) + bsp[0]
    return x_ca * jax.nn.sigmoid(conv)            # (B, C, H, W)


if __name__ == "__main__":
    B, C, H, W = 2, 16, 16, 16
    ratio = 8
    Ch = C // ratio

    key = jax.random.PRNGKey(0)
    ks = jax.random.split(key, 7)
    x = jax.random.normal(ks[0], (B, C, H, W), jnp.float32)
    w1 = jax.random.normal(ks[1], (Ch, C), jnp.float32) * 0.3       # Conv2d(C, C//8, 1) weight
    b1 = jax.random.normal(ks[2], (Ch, 1), jnp.float32) * 0.1
    w2 = jax.random.normal(ks[3], (C, Ch), jnp.float32) * 0.3       # Conv2d(C//8, C, 1) weight
    b2 = jax.random.normal(ks[4], (C, 1), jnp.float32) * 0.1
    wsp = jax.random.normal(ks[5], (2 * NTAPS,), jnp.float32) * 0.2  # Conv2d(2,1,7) weight, flat
    bsp = jax.random.normal(ks[6], (1,), jnp.float32) * 0.1

    out = jax.block_until_ready(cbam_forward(x, w1, b1, w2, b2, wsp, bsp))
    ref = jax.block_until_ready(cbam_ref(x, w1, b1, w2, b2, wsp, bsp))

    out_np, ref_np = np.asarray(out), np.asarray(ref)
    if not np.allclose(out_np, ref_np, atol=1e-3, rtol=1e-3):
        raise AssertionError(
            f"Pallas CBAM mismatch, max abs err {np.max(np.abs(out_np - ref_np))}")
    print("KERNEL_OK")
</pallas_src>

<mosaic_0001>
module attributes {stable_mosaic.version = 11 : i64} {
  func.func @_cbam_kernel(%arg0: i32, %arg1: memref<1x16x256xf32, #tpu.memory_space<vmem>>, %arg2: memref<2x16xf32, #tpu.memory_space<vmem>>, %arg3: memref<2x1xf32, #tpu.memory_space<vmem>>, %arg4: memref<16x2xf32, #tpu.memory_space<vmem>>, %arg5: memref<16x1xf32, #tpu.memory_space<vmem>>, %arg6: memref<49x512xf32, #tpu.memory_space<vmem>>, %arg7: memref<1xf32, #tpu.memory_space<smem>>, %arg8: memref<1x16x256xf32, #tpu.memory_space<vmem>>) attributes {dimension_semantics = [#tpu.dimension_semantics<parallel>], iteration_bounds = array<i64: 2>, scalar_prefetch = 0 : i64, scratch_operands = 0 : i64, tpu.core_type = #tpu.core_type<tc>, window_params = [{transform_indices = @transform_0, window_bounds = array<i64: 1, 16, 256>}, {pipeline_mode = #tpu.pipeline_mode<synchronous>, transform_indices = @transform_1, window_bounds = array<i64: 2, 16>}, {pipeline_mode = #tpu.pipeline_mode<synchronous>, transform_indices = @transform_2, window_bounds = array<i64: 2, 1>}, {pipeline_mode = #tpu.pipeline_mode<synchronous>, transform_indices = @transform_3, window_bounds = array<i64: 16, 2>}, {pipeline_mode = #tpu.pipeline_mode<synchronous>, transform_indices = @transform_4, window_bounds = array<i64: 16, 1>}, {pipeline_mode = #tpu.pipeline_mode<synchronous>, transform_indices = @transform_5, window_bounds = array<i64: 49, 512>}, {transform_indices = @transform_6, window_bounds = array<i64: 1>}, {transform_indices = @transform_7, window_bounds = array<i64: 1, 16, 256>}]} {
    %c0 = arith.constant 0 : index
    %c0_0 = arith.constant 0 : index
    %c0_1 = arith.constant 0 : index
    %0 = vector.load %arg1[%c0, %c0_0, %c0_1] : memref<1x16x256xf32, #tpu.memory_space<vmem>>, vector<1x16x256xf32>
    %1 = vector.shape_cast %0 : vector<1x16x256xf32> to vector<16x256xf32>
    %cst = arith.constant dense<0.000000e+00> : vector<16xf32>
    %2 = vector.multi_reduction <add>, %1, %cst [1] : vector<16x256xf32> to vector<16xf32>
    %3 = vector.shape_cast %2 : vector<16xf32> to vector<16x1xf32>
    %cst_2 = arith.constant 3.906250e-03 : f32
    %4 = vector.broadcast %cst_2 : f32 to vector<16x1xf32>
    %5 = arith.mulf %3, %4 : vector<16x1xf32>
    %cst_3 = arith.constant dense<0xFF800000> : vector<16xf32>
    %6 = vector.multi_reduction <maximumf>, %1, %cst_3 [1] : vector<16x256xf32> to vector<16xf32>
    %7 = vector.shape_cast %6 : vector<16xf32> to vector<16x1xf32>
    %8 = tpu.iota {dimensions = array<i32: 1>} : vector<16x2xi32>
    %c0_i32 = arith.constant 0 : i32
    %9 = vector.broadcast %c0_i32 : i32 to vector<16x2xi32>
    %10 = arith.cmpi eq, %8, %9 : vector<16x2xi32>
    %11 = vector.shape_cast %5 : vector<16x1xf32> to vector<16x1xf32>
    %12 = vector.broadcast %11 : vector<16x1xf32> to vector<16x2xf32>
    %13 = vector.shape_cast %7 : vector<16x1xf32> to vector<16x1xf32>
    %14 = vector.broadcast %13 : vector<16x1xf32> to vector<16x2xf32>
    %15 = arith.select %10, %12, %14 : vector<16x2xi1>, vector<16x2xf32>
    %c0_4 = arith.constant 0 : index
    %c0_5 = arith.constant 0 : index
    %16 = vector.load %arg2[%c0_4, %c0_5] : memref<2x16xf32, #tpu.memory_space<vmem>>, vector<2x16xf32>
    %17 = arith.truncf %16 : vector<2x16xf32> to vector<2x16xbf16>
    %18 = arith.truncf %15 : vector<16x2xf32> to vector<16x2xbf16>
    %cst_6 = arith.constant dense<0.000000e+00> : vector<2x2xf32>
    %19 = tpu.matmul %17, %18, %cst_6 {dimension_numbers = #tpu.dot_dimension_numbers<[1], [0], [0], [1], [0, 0, 1, 1], [], []>} : vector<2x16xbf16>, vector<16x2xbf16>, vector<2x2xf32> -> vector<2x2xf32>
    %c0_7 = arith.constant 0 : index
    %c0_8 = arith.constant 0 : index
    %20 = vector.load %arg3[%c0_7, %c0_8] : memref<2x1xf32, #tpu.memory_space<vmem>>, vector<2x1xf32>
    %21 = vector.broadcast %20 : vector<2x1xf32> to vector<2x2xf32>
    %22 = arith.addf %19, %21 : vector<2x2xf32>
    %cst_9 = arith.constant 0.000000e+00 : f32
    %23 = vector.broadcast %cst_9 : f32 to vector<2x2xf32>
    %24 = arith.maximumf %22, %23 : vector<2x2xf32>
    %c0_10 = arith.constant 0 : index
    %c0_11 = arith.constant 0 : index
    %25 = vector.load %arg4[%c0_10, %c0_11] : memref<16x2xf32, #tpu.memory_space<vmem>>, vector<16x2xf32>
    %26 = arith.truncf %25 : vector<16x2xf32> to vector<16x2xbf16>
    %27 = arith.truncf %24 : vector<2x2xf32> to vector<2x2xbf16>
    %cst_12 = arith.constant dense<0.000000e+00> : vector<16x2xf32>
    %28 = tpu.matmul %26, %27, %cst_12 {dimension_numbers = #tpu.dot_dimension_numbers<[1], [0], [0], [1], [0, 0, 1, 1], [], []>} : vector<16x2xbf16>, vector<2x2xbf16>, vector<16x2xf32> -> vector<16x2xf32>
    %c0_13 = arith.constant 0 : index
    %c0_14 = arith.constant 0 : index
    %29 = vector.load %arg5[%c0_13, %c0_14] : memref<16x1xf32, #tpu.memory_space<vmem>>, vector<16x1xf32>
    %30 = vector.broadcast %29 : vector<16x1xf32> to vector<16x2xf32>
    %31 = arith.addf %28, %30 : vector<16x2xf32>
    %32 = vector.extract_strided_slice %31 {offsets = [0, 0], sizes = [16, 1], strides = [1, 1]} : vector<16x2xf32> to vector<16x1xf32>
    %33 = vector.extract_strided_slice %31 {offsets = [0, 1], sizes = [16, 1], strides = [1, 1]} : vector<16x2xf32> to vector<16x1xf32>
    %34 = arith.addf %32, %33 : vector<16x1xf32>
    %35 = arith.negf %34 : vector<16x1xf32>
    %36 = math.exp %35 : vector<16x1xf32>
    %cst_15 = arith.constant 1.000000e+00 : f32
    %37 = vector.broadcast %cst_15 : f32 to vector<16x1xf32>
    %38 = arith.addf %37, %36 : vector<16x1xf32>
    %39 = arith.divf %37, %38 : vector<16x1xf32>
    %40 = vector.broadcast %39 : vector<16x1xf32> to vector<16x256xf32>
    %41 = arith.mulf %1, %40 : vector<16x256xf32>
    %c0_16 = arith.constant 0 : index
    %c0_17 = arith.constant 0 : index
    %c0_18 = arith.constant 0 : index
    %42 = vector.load %arg8[%c0_16, %c0_17, %c0_18] : memref<1x16x256xf32, #tpu.memory_space<vmem>>, vector<1x16x256xf32>
    %43 = vector.shape_cast %42 : vector<1x16x256xf32> to vector<16x256xf32>
    %44 = vector.shape_cast %41 : vector<16x256xf32> to vector<1x16x256xf32>
    tpu.vector_store %arg8[%c0_16, %c0_17, %c0_18], %44 {strides = array<i32>} : memref<1x16x256xf32, #tpu.memory_space<vmem>>, vector<1x16x256xf32>,
    %c0_19 = arith.constant 0 : index
    %c0_20 = arith.constant 0 : index
    %c0_21 = arith.constant 0 : index
    %45 = vector.load %arg8[%c0_19, %c0_20, %c0_21] : memref<1x16x256xf32, #tpu.memory_space<vmem>>, vector<1x16x256xf32>
    %46 = vector.shape_cast %45 : vector<1x16x256xf32> to vector<16x256xf32>
    %cst_22 = arith.constant dense<0.000000e+00> : vector<256xf32>
    %47 = vector.multi_reduction <add>, %46, %cst_22 [0] : vector<16x256xf32> to vector<256xf32>
    %48 = vector.shape_cast %47 : vector<256xf32> to vector<1x256xf32>
    %cst_23 = arith.constant 1.600000e+01 : f32
    %49 = vector.broadcast %cst_23 : f32 to vector<1x256xf32>
    %50 = arith.divf %48, %49 : vector<1x256xf32>
    %cst_24 = arith.constant dense<0xFF800000> : vector<256xf32>
    %51 = vector.multi_reduction <maximumf>, %46, %cst_24 [0] : vector<16x256xf32> to vector<256xf32>
    %52 = vector.shape_cast %51 : vector<256xf32> to vector<1x256xf32>
    %53 = tpu.concatenate %50, %52 in 1 : vector<1x256xf32>, vector<1x256xf32> -> vector<1x512xf32>
    %cst_25 = arith.constant 0.000000e+00 : f32
    %54 = vector.broadcast %cst_25 : f32 to vector<1x512xf32>
    %c51_i32 = arith.constant 51 : i32
    %55 = tpu.dynamic_rotate %53 by %c51_i32 dim 1 : vector<1x512xf32>, i32 -> vector<1x512xf32>
    %c0_26 = arith.constant 0 : index
    %c0_27 = arith.constant 0 : index
    %56 = vector.load %arg6[%c0_26, %c0_27] : memref<49x512xf32, #tpu.memory_space<vmem>>, vector<1x512xf32>
    %57 = arith.mulf %56, %55 : vector<1x512xf32>
    %58 = arith.addf %54, %57 : vector<1x512xf32>
    %c50_i32 = arith.constant 50 : i32
    %59 = tpu.dynamic_rotate %53 by %c50_i32 dim 1 : vector<1x512xf32>, i32 -> vector<1x512xf32>
    %c1 = arith.constant 1 : index
    %c0_28 = arith.constant 0 : index
    %60 = vector.load %arg6[%c1, %c0_28] : memref<49x512xf32, #tpu.memory_space<vmem>>, vector<1x512xf32>
    %61 = arith.mulf %60, %59 : vector<1x512xf32>
    %62 = arith.addf %58, %61 : vector<1x512xf32>
    %c49_i32 = arith.constant 49 : i32
    %63 = tpu.dynamic_rotate %53 by %c49_i32 dim 1 : vector<1x512xf32>, i32 -> vector<1x512xf32>
    %c2 = arith.constant 2 : index
    %c0_29 = arith.constant 0 : index
    %64 = vector.load %arg6[%c2, %c0_29] : memref<49x512xf32, #tpu.memory_space<vmem>>, vector<1x512xf32>
    %65 = arith.mulf %64, %63 : vector<1x512xf32>
    %66 = arith.addf %62, %65 : vector<1x512xf32>
    %c48_i32 = arith.constant 48 : i32
    %67 = tpu.dynamic_rotate %53 by %c48_i32 dim 1 : vector<1x512xf32>, i32 -> vector<1x512xf32>
    %c3 = arith.constant 3 : index
    %c0_30 = arith.constant 0 : index
    %68 = vector.load %arg6[%c3, %c0_30] : memref<49x512xf32, #tpu.memory_space<vmem>>, vector<1x512xf32>
    %69 = arith.mulf %68, %67 : vector<1x512xf32>
    %70 = arith.addf %66, %69 : vector<1x512xf32>
    %c47_i32 = arith.constant 47 : i32
    %71 = tpu.dynamic_rotate %53 by %c47_i32 dim 1 : vector<1x512xf32>, i32 -> vector<1x512xf32>
    %c4 = arith.constant 4 : index
    %c0_31 = arith.constant 0 : index
    %72 = vector.load %arg6[%c4, %c0_31] : memref<49x512xf32, #tpu.memory_space<vmem>>, vector<1x512xf32>
    %73 = arith.mulf %72, %71 : vector<1x512xf32>
    %74 = arith.addf %70, %73 : vector<1x512xf32>
    %c46_i32 = arith.constant 46 : i32
    %75 = tpu.dynamic_rotate %53 by %c46_i32 dim 1 : vector<1x512xf32>, i32 -> vector<1x512xf32>
    %c5 = arith.constant 5 : index
    %c0_32 = arith.constant 0 : index
    %76 = vector.load %arg6[%c5, %c0_32] : memref<49x512xf32, #tpu.memory_space<vmem>>, vector<1x512xf32>
    %77 = arith.mulf %76, %75 : vector<1x512xf32>
    %78 = arith.addf %74, %77 : vector<1x512xf32>
    %c45_i32 = arith.constant 45 : i32
    %79 = tpu.dynamic_rotate %53 by %c45_i32 dim 1 : vector<1x512xf32>, i32 -> vector<1x512xf32>
    %c6 = arith.constant 6 : index
    %c0_33 = arith.constant 0 : index
    %80 = vector.load %arg6[%c6, %c0_33] : memref<49x512xf32, #tpu.memory_space<vmem>>, vector<1x512xf32>
    %81 = arith.mulf %80, %79 : vector<1x512xf32>
    %82 = arith.addf %78, %81 : vector<1x512xf32>
    %c35_i32 = arith.constant 35 : i32
    %83 = tpu.dynamic_rotate %53 by %c35_i32 dim 1 : vector<1x512xf32>, i32 -> vector<1x512xf32>
    %c7 = arith.constant 7 : index
    %c0_34 = arith.constant 0 : index
    %84 = vector.load %arg6[%c7, %c0_34] : memref<49x512xf32, #tpu.memory_space<vmem>>, vector<1x512xf32>
    %85 = arith.mulf %84, %83 : vector<1x512xf32>
    %86 = arith.addf %82, %85 : vector<1x512xf32>
    %c34_i32 = arith.constant 34 : i32
    %87 = tpu.dynamic_rotate %53 by %c34_i32 dim 1 : vector<1x512xf32>, i32 -> vector<1x512xf32>
    %c8 = arith.constant 8 : index
    %c0_35 = arith.constant 0 : index
    %88 = vector.load %arg6[%c8, %c0_35] : memref<49x512xf32, #tpu.memory_space<vmem>>, vector<1x512xf32>
    %89 = arith.mulf %88, %87 : vector<1x512xf32>
    %90 = arith.addf %86, %89 : vector<1x512xf32>
    %c33_i32 = arith.constant 33 : i32
    %91 = tpu.dynamic_rotate %53 by %c33_i32 dim 1 : vector<1x512xf32>, i32 -> vector<1x512xf32>
    %c9 = arith.constant 9 : index
    %c0_36 = arith.constant 0 : index
    %92 = vector.load %arg6[%c9, %c0_36] : memref<49x512xf32, #tpu.memory_space<vmem>>, vector<1x512xf32>
    %93 = arith.mulf %92, %91 : vector<1x512xf32>
    %94 = arith.addf %90, %93 : vector<1x512xf32>
    %c32_i32 = arith.constant 32 : i32
    %95 = tpu.dynamic_rotate %53 by %c32_i32 dim 1 : vector<1x512xf32>, i32 -> vector<1x512xf32>
    %c10 = arith.constant 10 : index
    %c0_37 = arith.constant 0 : index
    %96 = vector.load %arg6[%c10, %c0_37] : memref<49x512xf32, #tpu.memory_space<vmem>>, vector<1x512xf32>
    %97 = arith.mulf %96, %95 : vector<1x512xf32>
    %98 = arith.addf %94, %97 : vector<1x512xf32>
    %c31_i32 = arith.constant 31 : i32
    %99 = tpu.dynamic_rotate %53 by %c31_i32 dim 1 : vector<1x512xf32>, i32 -> vector<1x512xf32>
    %c11 = arith.constant 11 : index
    %c0_38 = arith.constant 0 : index
    %100 = vector.load %arg6[%c11, %c0_38] : memref<49x512xf32, #tpu.memory_space<vmem>>, vector<1x512xf32>
    %101 = arith.mulf %100, %99 : vector<1x512xf32>
    %102 = arith.addf %98, %101 : vector<1x512xf32>
    %c30_i32 = arith.constant 30 : i32
    %103 = tpu.dynamic_rotate %53 by %c30_i32 dim 1 : vector<1x512xf32>, i32 -> vector<1x512xf32>
    %c12 = arith.constant 12 : index
    %c0_39 = arith.constant 0 : index
    %104 = vector.load %arg6[%c12, %c0_39] : memref<49x512xf32, #tpu.memory_space<vmem>>, vector<1x512xf32>
    %105 = arith.mulf %104, %103 : vector<1x512xf32>
    %106 = arith.addf %102, %105 : vector<1x512xf32>
    %c29_i32 = arith.constant 29 : i32
    %107 = tpu.dynamic_rotate %53 by %c29_i32 dim 1 : vector<1x512xf32>, i32 -> vector<1x512xf32>
    %c13 = arith.constant 13 : index
    %c0_40 = arith.constant 0 : index
    %108 = vector.load %arg6[%c13, %c0_40] : memref<49x512xf32, #tpu.memory_space<vmem>>, vector<1x512xf32>
    %109 = arith.mulf %108, %107 : vector<1x512xf32>
    %110 = arith.addf %106, %109 : vector<1x512xf32>
    %c19_i32 = arith.constant 19 : i32
    %111 = tpu.dynamic_rotate %53 by %c19_i32 dim 1 : vector<1x512xf32>, i32 -> vector<1x512xf32>
    %c14 = arith.constant 14 : index
    %c0_41 = arith.constant 0 : index
    %112 = vector.load %arg6[%c14, %c0_41] : memref<49x512xf32, #tpu.memory_space<vmem>>, vector<1x512xf32>
    %113 = arith.mulf %112, %111 : vector<1x512xf32>
    %114 = arith.addf %110, %113 : vector<1x512xf32>
    %c18_i32 = arith.constant 18 : i32
    %115 = tpu.dynamic_rotate %53 by %c18_i32 dim 1 : vector<1x512xf32>, i32 -> vector<1x512xf32>
    %c15 = arith.constant 15 : index
    %c0_42 = arith.constant 0 : index
    %116 = vector.load %arg6[%c15, %c0_42] : memref<49x512xf32, #tpu.memory_space<vmem>>, vector<1x512xf32>
    %117 = arith.mulf %116, %115 : vector<1x512xf32>
    %118 = arith.addf %114, %117 : vector<1x512xf32>
    %c17_i32 = arith.constant 17 : i32
    %119 = tpu.dynamic_rotate %53 by %c17_i32 dim 1 : vector<1x512xf32>, i32 -> vector<1x512xf32>
    %c16 = arith.constant 16 : index
    %c0_43 = arith.constant 0 : index
    %120 = vector.load %arg6[%c16, %c0_43] : memref<49x512xf32, #tpu.memory_space<vmem>>, vector<1x512xf32>
    %121 = arith.mulf %120, %119 : vector<1x512xf32>
    %122 = arith.addf %118, %121 : vector<1x512xf32>
    %c16_i32 = arith.constant 16 : i32
    %123 = tpu.dynamic_rotate %53 by %c16_i32 dim 1 : vector<1x512xf32>, i32 -> vector<1x512xf32>
    %c17 = arith.constant 17 : index
    %c0_44 = arith.constant 0 : index
    %124 = vector.load %arg6[%c17, %c0_44] : memref<49x512xf32, #tpu.memory_space<vmem>>, vector<1x512xf32>
    %125 = arith.mulf %124, %123 : vector<1x512xf32>
    %126 = arith.addf %122, %125 : vector<1x512xf32>
    %c15_i32 = arith.constant 15 : i32
    %127 = tpu.dynamic_rotate %53 by %c15_i32 dim 1 : vector<1x512xf32>, i32 -> vector<1x512xf32>
    %c18 = arith.constant 18 : index
    %c0_45 = arith.constant 0 : index
    %128 = vector.load %arg6[%c18, %c0_45] : memref<49x512xf32, #tpu.memory_space<vmem>>, vector<1x512xf32>
    %129 = arith.mulf %128, %127 : vector<1x512xf32>
    %130 = arith.addf %126, %129 : vector<1x512xf32>
    %c14_i32 = arith.constant 14 : i32
    %131 = tpu.dynamic_rotate %53 by %c14_i32 dim 1 : vector<1x512xf32>, i32 -> vector<1x512xf32>
    %c19 = arith.constant 19 : index
    %c0_46 = arith.constant 0 : index
    %132 = vector.load %arg6[%c19, %c0_46] : memref<49x512xf32, #tpu.memory_space<vmem>>, vector<1x512xf32>
    %133 = arith.mulf %132, %131 : vector<1x512xf32>
    %134 = arith.addf %130, %133 : vector<1x512xf32>
    %c13_i32 = arith.constant 13 : i32
    %135 = tpu.dynamic_rotate %53 by %c13_i32 dim 1 : vector<1x512xf32>, i32 -> vector<1x512xf32>
    %c20 = arith.constant 20 : index
    %c0_47 = arith.constant 0 : index
    %136 = vector.load %arg6[%c20, %c0_47] : memref<49x512xf32, #tpu.memory_space<vmem>>, vector<1x512xf32>
    %137 = arith.mulf %136, %135 : vector<1x512xf32>
    %138 = arith.addf %134, %137 : vector<1x512xf32>
    %c3_i32 = arith.constant 3 : i32
    %139 = tpu.dynamic_rotate %53 by %c3_i32 dim 1 : vector<1x512xf32>, i32 -> vector<1x512xf32>
    %c21 = arith.constant 21 : index
    %c0_48 = arith.constant 0 : index
    %140 = vector.load %arg6[%c21, %c0_48] : memref<49x512xf32, #tpu.memory_space<vmem>>, vector<1x512xf32>
    %141 = arith.mulf %140, %139 : vector<1x512xf32>
    %142 = arith.addf %138, %141 : vector<1x512xf32>
    %c2_i32 = arith.constant 2 : i32
    %143 = tpu.dynamic_rotate %53 by %c2_i32 dim 1 : vector<1x512xf32>, i32 -> vector<1x512xf32>
    %c22 = arith.constant 22 : index
    %c0_49 = arith.constant 0 : index
    %144 = vector.load %arg6[%c22, %c0_49] : memref<49x512xf32, #tpu.memory_space<vmem>>, vector<1x512xf32>
    %145 = arith.mulf %144, %143 : vector<1x512xf32>
    %146 = arith.addf %142, %145 : vector<1x512xf32>
    %c1_i32 = arith.constant 1 : i32
    %147 = tpu.dynamic_rotate %53 by %c1_i32 dim 1 : vector<1x512xf32>, i32 -> vector<1x512xf32>
    %c23 = arith.constant 23 : index
    %c0_50 = arith.constant 0 : index
    %148 = vector.load %arg6[%c23, %c0_50] : memref<49x512xf32, #tpu.memory_space<vmem>>, vector<1x512xf32>
    %149 = arith.mulf %148, %147 : vector<1x512xf32>
    %150 = arith.addf %146, %149 : vector<1x512xf32>
    %c24 = arith.constant 24 : index
    %c0_51 = arith.constant 0 : index
    %151 = vector.load %arg6[%c24, %c0_51] : memref<49x512xf32, #tpu.memory_space<vmem>>, vector<1x512xf32>
    %152 = arith.mulf %151, %53 : vector<1x512xf32>
    %153 = arith.addf %150, %152 : vector<1x512xf32>
    %c511_i32 = arith.constant 511 : i32
    %154 = tpu.dynamic_rotate %53 by %c511_i32 dim 1 : vector<1x512xf32>, i32 -> vector<1x512xf32>
    %c25 = arith.constant 25 : index
    %c0_52 = arith.constant 0 : index
    %155 = vector.load %arg6[%c25, %c0_52] : memref<49x512xf32, #tpu.memory_space<vmem>>, vector<1x512xf32>
    %156 = arith.mulf %155, %154 : vector<1x512xf32>
    %157 = arith.addf %153, %156 : vector<1x512xf32>
    %c510_i32 = arith.constant 510 : i32
    %158 = tpu.dynamic_rotate %53 by %c510_i32 dim 1 : vector<1x512xf32>, i32 -> vector<1x512xf32>
    %c26 = arith.constant 26 : index
    %c0_53 = arith.constant 0 : index
    %159 = vector.load %arg6[%c26, %c0_53] : memref<49x512xf32, #tpu.memory_space<vmem>>, vector<1x512xf32>
    %160 = arith.mulf %159, %158 : vector<1x512xf32>
    %161 = arith.addf %157, %160 : vector<1x512xf32>
    %c509_i32 = arith.constant 509 : i32
    %162 = tpu.dynamic_rotate %53 by %c509_i32 dim 1 : vector<1x512xf32>, i32 -> vector<1x512xf32>
    %c27 = arith.constant 27 : index
    %c0_54 = arith.constant 0 : index
    %163 = vector.load %arg6[%c27, %c0_54] : memref<49x512xf32, #tpu.memory_space<vmem>>, vector<1x512xf32>
    %164 = arith.mulf %163, %162 : vector<1x512xf32>
    %165 = arith.addf %161, %164 : vector<1x512xf32>
    %c499_i32 = arith.constant 499 : i32
    %166 = tpu.dynamic_rotate %53 by %c499_i32 dim 1 : vector<1x512xf32>, i32 -> vector<1x512xf32>
    %c28 = arith.constant 28 : index
    %c0_55 = arith.constant 0 : index
    %167 = vector.load %arg6[%c28, %c0_55] : memref<49x512xf32, #tpu.memory_space<vmem>>, vector<1x512xf32>
    %168 = arith.mulf %167, %166 : vector<1x512xf32>
    %169 = arith.addf %165, %168 : vector<1x512xf32>
    %c498_i32 = arith.constant 498 : i32
    %170 = tpu.dynamic_rotate %53 by %c498_i32 dim 1 : vector<1x512xf32>, i32 -> vector<1x512xf32>
    %c29 = arith.constant 29 : index
    %c0_56 = arith.constant 0 : index
    %171 = vector.load %arg6[%c29, %c0_56] : memref<49x512xf32, #tpu.memory_space<vmem>>, vector<1x512xf32>
    %172 = arith.mulf %171, %170 : vector<1x512xf32>
    %173 = arith.addf %169, %172 : vector<1x512xf32>
    %c497_i32 = arith.constant 497 : i32
    %174 = tpu.dynamic_rotate %53 by %c497_i32 dim 1 : vector<1x512xf32>, i32 -> vector<1x512xf32>
    %c30 = arith.constant 30 : index
    %c0_57 = arith.constant 0 : index
    %175 = vector.load %arg6[%c30, %c0_57] : memref<49x512xf32, #tpu.memory_space<vmem>>, vector<1x512xf32>
    %176 = arith.mulf %175, %174 : vector<1x512xf32>
    %177 = arith.addf %173, %176 : vector<1x512xf32>
    %c496_i32 = arith.constant 496 : i32
    %178 = tpu.dynamic_rotate %53 by %c496_i32 dim 1 : vector<1x512xf32>, i32 -> vector<1x512xf32>
    %c31 = arith.constant 31 : index
    %c0_58 = arith.constant 0 : index
    %179 = vector.load %arg6[%c31, %c0_58] : memref<49x512xf32, #tpu.memory_space<vmem>>, vector<1x512xf32>
    %180 = arith.mulf %179, %178 : vector<1x512xf32>
    %181 = arith.addf %177, %180 : vector<1x512xf32>
    %c495_i32 = arith.constant 495 : i32
    %182 = tpu.dynamic_rotate %53 by %c495_i32 dim 1 : vector<1x512xf32>, i32 -> vector<1x512xf32>
    %c32 = arith.constant 32 : index
    %c0_59 = arith.constant 0 : index
    %183 = vector.load %arg6[%c32, %c0_59] : memref<49x512xf32, #tpu.memory_space<vmem>>, vector<1x512xf32>
    %184 = arith.mulf %183, %182 : vector<1x512xf32>
    %185 = arith.addf %181, %184 : vector<1x512xf32>
    %c494_i32 = arith.constant 494 : i32
    %186 = tpu.dynamic_rotate %53 by %c494_i32 dim 1 : vector<1x512xf32>, i32 -> vector<1x512xf32>
    %c33 = arith.constant 33 : index
    %c0_60 = arith.constant 0 : index
    %187 = vector.load %arg6[%c33, %c0_60] : memref<49x512xf32, #tpu.memory_space<vmem>>, vector<1x512xf32>
    %188 = arith.mulf %187, %186 : vector<1x512xf32>
    %189 = arith.addf %185, %188 : vector<1x512xf32>
    %c493_i32 = arith.constant 493 : i32
    %190 = tpu.dynamic_rotate %53 by %c493_i32 dim 1 : vector<1x512xf32>, i32 -> vector<1x512xf32>
    %c34 = arith.constant 34 : index
    %c0_61 = arith.constant 0 : index
    %191 = vector.load %arg6[%c34, %c0_61] : memref<49x512xf32, #tpu.memory_space<vmem>>, vector<1x512xf32>
    %192 = arith.mulf %191, %190 : vector<1x512xf32>
    %193 = arith.addf %189, %192 : vector<1x512xf32>
    %c483_i32 = arith.constant 483 : i32
    %194 = tpu.dynamic_rotate %53 by %c483_i32 dim 1 : vector<1x512xf32>, i32 -> vector<1x512xf32>
    %c35 = arith.constant 35 : index
    %c0_62 = arith.constant 0 : index
    %195 = vector.load %arg6[%c35, %c0_62] : memref<49x512xf32, #tpu.memory_space<vmem>>, vector<1x512xf32>
    %196 = arith.mulf %195, %194 : vector<1x512xf32>
    %197 = arith.addf %193, %196 : vector<1x512xf32>
    %c482_i32 = arith.constant 482 : i32
    %198 = tpu.dynamic_rotate %53 by %c482_i32 dim 1 : vector<1x512xf32>, i32 -> vector<1x512xf32>
    %c36 = arith.constant 36 : index
    %c0_63 = arith.constant 0 : index
    %199 = vector.load %arg6[%c36, %c0_63] : memref<49x512xf32, #tpu.memory_space<vmem>>, vector<1x512xf32>
    %200 = arith.mulf %199, %198 : vector<1x512xf32>
    %201 = arith.addf %197, %200 : vector<1x512xf32>
    %c481_i32 = arith.constant 481 : i32
    %202 = tpu.dynamic_rotate %53 by %c481_i32 dim 1 : vector<1x512xf32>, i32 -> vector<1x512xf32>
    %c37 = arith.constant 37 : index
    %c0_64 = arith.constant 0 : index
    %203 = vector.load %arg6[%c37, %c0_64] : memref<49x512xf32, #tpu.memory_space<vmem>>, vector<1x512xf32>
    %204 = arith.mulf %203, %202 : vector<1x512xf32>
    %205 = arith.addf %201, %204 : vector<1x512xf32>
    %c480_i32 = arith.constant 480 : i32
    %206 = tpu.dynamic_rotate %53 by %c480_i32 dim 1 : vector<1x512xf32>, i32 -> vector<1x512xf32>
    %c38 = arith.constant 38 : index
    %c0_65 = arith.constant 0 : index
    %207 = vector.load %arg6[%c38, %c0_65] : memref<49x512xf32, #tpu.memory_space<vmem>>, vector<1x512xf32>
    %208 = arith.mulf %207, %206 : vector<1x512xf32>
    %209 = arith.addf %205, %208 : vector<1x512xf32>
    %c479_i32 = arith.constant 479 : i32
    %210 = tpu.dynamic_rotate %53 by %c479_i32 dim 1 : vector<1x512xf32>, i32 -> vector<1x512xf32>
    %c39 = arith.constant 39 : index
    %c0_66 = arith.constant 0 : index
    %211 = vector.load %arg6[%c39, %c0_66] : memref<49x512xf32, #tpu.memory_space<vmem>>, vector<1x512xf32>
    %212 = arith.mulf %211, %210 : vector<1x512xf32>
    %213 = arith.addf %209, %212 : vector<1x512xf32>
    %c478_i32 = arith.constant 478 : i32
    %214 = tpu.dynamic_rotate %53 by %c478_i32 dim 1 : vector<1x512xf32>, i32 -> vector<1x512xf32>
    %c40 = arith.constant 40 : index
    %c0_67 = arith.constant 0 : index
    %215 = vector.load %arg6[%c40, %c0_67] : memref<49x512xf32, #tpu.memory_space<vmem>>, vector<1x512xf32>
    %216 = arith.mulf %215, %214 : vector<1x512xf32>
    %217 = arith.addf %213, %216 : vector<1x512xf32>
    %c477_i32 = arith.constant 477 : i32
    %218 = tpu.dynamic_rotate %53 by %c477_i32 dim 1 : vector<1x512xf32>, i32 -> vector<1x512xf32>
    %c41 = arith.constant 41 : index
    %c0_68 = arith.constant 0 : index
    %219 = vector.load %arg6[%c41, %c0_68] : memref<49x512xf32, #tpu.memory_space<vmem>>, vector<1x512xf32>
    %220 = arith.mulf %219, %218 : vector<1x512xf32>
    %221 = arith.addf %217, %220 : vector<1x512xf32>
    %c467_i32 = arith.constant 467 : i32
    %222 = tpu.dynamic_rotate %53 by %c467_i32 dim 1 : vector<1x512xf32>, i32 -> vector<1x512xf32>
    %c42 = arith.constant 42 : index
    %c0_69 = arith.constant 0 : index
    %223 = vector.load %arg6[%c42, %c0_69] : memref<49x512xf32, #tpu.memory_space<vmem>>, vector<1x512xf32>
    %224 = arith.mulf %223, %222 : vector<1x512xf32>
    %225 = arith.addf %221, %224 : vector<1x512xf32>
    %c466_i32 = arith.constant 466 : i32
    %226 = tpu.dynamic_rotate %53 by %c466_i32 dim 1 : vector<1x512xf32>, i32 -> vector<1x512xf32>
    %c43 = arith.constant 43 : index
    %c0_70 = arith.constant 0 : index
    %227 = vector.load %arg6[%c43, %c0_70] : memref<49x512xf32, #tpu.memory_space<vmem>>, vector<1x512xf32>
    %228 = arith.mulf %227, %226 : vector<1x512xf32>
    %229 = arith.addf %225, %228 : vector<1x512xf32>
    %c465_i32 = arith.constant 465 : i32
    %230 = tpu.dynamic_rotate %53 by %c465_i32 dim 1 : vector<1x512xf32>, i32 -> vector<1x512xf32>
    %c44 = arith.constant 44 : index
    %c0_71 = arith.constant 0 : index
    %231 = vector.load %arg6[%c44, %c0_71] : memref<49x512xf32, #tpu.memory_space<vmem>>, vector<1x512xf32>
    %232 = arith.mulf %231, %230 : vector<1x512xf32>
    %233 = arith.addf %229, %232 : vector<1x512xf32>
    %c464_i32 = arith.constant 464 : i32
    %234 = tpu.dynamic_rotate %53 by %c464_i32 dim 1 : vector<1x512xf32>, i32 -> vector<1x512xf32>
    %c45 = arith.constant 45 : index
    %c0_72 = arith.constant 0 : index
    %235 = vector.load %arg6[%c45, %c0_72] : memref<49x512xf32, #tpu.memory_space<vmem>>, vector<1x512xf32>
    %236 = arith.mulf %235, %234 : vector<1x512xf32>
    %237 = arith.addf %233, %236 : vector<1x512xf32>
    %c463_i32 = arith.constant 463 : i32
    %238 = tpu.dynamic_rotate %53 by %c463_i32 dim 1 : vector<1x512xf32>, i32 -> vector<1x512xf32>
    %c46 = arith.constant 46 : index
    %c0_73 = arith.constant 0 : index
    %239 = vector.load %arg6[%c46, %c0_73] : memref<49x512xf32, #tpu.memory_space<vmem>>, vector<1x512xf32>
    %240 = arith.mulf %239, %238 : vector<1x512xf32>
    %241 = arith.addf %237, %240 : vector<1x512xf32>
    %c462_i32 = arith.constant 462 : i32
    %242 = tpu.dynamic_rotate %53 by %c462_i32 dim 1 : vector<1x512xf32>, i32 -> vector<1x512xf32>
    %c47 = arith.constant 47 : index
    %c0_74 = arith.constant 0 : index
    %243 = vector.load %arg6[%c47, %c0_74] : memref<49x512xf32, #tpu.memory_space<vmem>>, vector<1x512xf32>
    %244 = arith.mulf %243, %242 : vector<1x512xf32>
    %245 = arith.addf %241, %244 : vector<1x512xf32>
    %c461_i32 = arith.constant 461 : i32
    %246 = tpu.dynamic_rotate %53 by %c461_i32 dim 1 : vector<1x512xf32>, i32 -> vector<1x512xf32>
    %c48 = arith.constant 48 : index
    %c0_75 = arith.constant 0 : index
    %247 = vector.load %arg6[%c48, %c0_75] : memref<49x512xf32, #tpu.memory_space<vmem>>, vector<1x512xf32>
    %248 = arith.mulf %247, %246 : vector<1x512xf32>
    %249 = arith.addf %245, %248 : vector<1x512xf32>
    %250 = vector.extract_strided_slice %249 {offsets = [0, 0], sizes = [1, 256], strides = [1, 1]} : vector<1x512xf32> to vector<1x256xf32>
    %251 = vector.extract_strided_slice %249 {offsets = [0, 256], sizes = [1, 256], strides = [1, 1]} : vector<1x512xf32> to vector<1x256xf32>
    %252 = arith.addf %250, %251 : vector<1x256xf32>
    %c0_76 = arith.constant 0 : index
    %253 = memref.load %arg7[%c0_76] : memref<1xf32, #tpu.memory_space<smem>>
    %254 = vector.broadcast %253 : f32 to vector<1x256xf32>
    %255 = arith.addf %252, %254 : vector<1x256xf32>
    %256 = arith.negf %255 : vector<1x256xf32>
    %257 = math.exp %256 : vector<1x256xf32>
    %cst_77 = arith.constant 1.000000e+00 : f32
    %258 = vector.broadcast %cst_77 : f32 to vector<1x256xf32>
    %259 = arith.addf %258, %257 : vector<1x256xf32>
    %260 = arith.divf %258, %259 : vector<1x256xf32>
    %c0_78 = arith.constant 0 : index
    %c0_79 = arith.constant 0 : index
    %c0_80 = arith.constant 0 : index
    %261 = vector.load %arg8[%c0_78, %c0_79, %c0_80] : memref<1x16x256xf32, #tpu.memory_space<vmem>>, vector<1x16x256xf32>
    %262 = vector.shape_cast %261 : vector<1x16x256xf32> to vector<16x256xf32>
    %263 = vector.broadcast %260 : vector<1x256xf32> to vector<16x256xf32>
    %264 = arith.mulf %262, %263 : vector<16x256xf32>
    %c0_81 = arith.constant 0 : index
    %c0_82 = arith.constant 0 : index
    %c0_83 = arith.constant 0 : index
    %265 = vector.load %arg8[%c0_81, %c0_82, %c0_83] : memref<1x16x256xf32, #tpu.memory_space<vmem>>, vector<1x16x256xf32>
    %266 = vector.shape_cast %265 : vector<1x16x256xf32> to vector<16x256xf32>
    %267 = vector.shape_cast %264 : vector<16x256xf32> to vector<1x16x256xf32>
    tpu.vector_store %arg8[%c0_81, %c0_82, %c0_83], %267 {strides = array<i32>} : memref<1x16x256xf32, #tpu.memory_space<vmem>>, vector<1x16x256xf32>,
    return
  }
  func.func @transform_0(%arg0: i32) -> (i32, i32, i32) {
    %c0_i32 = arith.constant 0 : i32
    %c0_i32_0 = arith.constant 0 : i32
    %c0_i32_1 = arith.constant 0 : i32
    return %arg0, %c0_i32, %c0_i32_0 : i32, i32, i32
  }
  func.func @transform_1(%arg0: i32) -> (i32, i32) {
    %c0_i32 = arith.constant 0 : i32
    %c0_i32_0 = arith.constant 0 : i32
    %c0_i32_1 = arith.constant 0 : i32
    return %c0_i32, %c0_i32_0 : i32, i32
  }
  func.func @transform_2(%arg0: i32) -> (i32, i32) {
    %c0_i32 = arith.constant 0 : i32
    %c0_i32_0 = arith.constant 0 : i32
    %c0_i32_1 = arith.constant 0 : i32
    return %c0_i32, %c0_i32_0 : i32, i32
  }
  func.func @transform_3(%arg0: i32) -> (i32, i32) {
    %c0_i32 = arith.constant 0 : i32
    %c0_i32_0 = arith.constant 0 : i32
    %c0_i32_1 = arith.constant 0 : i32
    return %c0_i32, %c0_i32_0 : i32, i32
  }
  func.func @transform_4(%arg0: i32) -> (i32, i32) {
    %c0_i32 = arith.constant 0 : i32
    %c0_i32_0 = arith.constant 0 : i32
    %c0_i32_1 = arith.constant 0 : i32
    return %c0_i32, %c0_i32_0 : i32, i32
  }
  func.func @transform_5(%arg0: i32) -> (i32, i32) {
    %c0_i32 = arith.constant 0 : i32
    %c0_i32_0 = arith.constant 0 : i32
    %c0_i32_1 = arith.constant 0 : i32
    return %c0_i32, %c0_i32_0 : i32, i32
  }
  func.func @transform_6(%arg0: i32) -> i32 {
    %c0_i32 = arith.constant 0 : i32
    %c0_i32_0 = arith.constant 0 : i32
    return %c0_i32 : i32
  }
  func.func @transform_7(%arg0: i32) -> (i32, i32, i32) {
    %c0_i32 = arith.constant 0 : i32
    %c0_i32_0 = arith.constant 0 : i32
    %c0_i32_1 = arith.constant 0 : i32
    return %arg0, %c0_i32, %c0_i32_0 : i32, i32, i32
  }
}

</mosaic_0001>

<llo_original>
// kernel: tpu_custom_call.1
$region0: #{tpu_custom_call.1}
  #allocation0 [shape = 'u32[]', space=smem, size = 0x4, offset = 0x4, fixed_abs, tag = 'smem constant byte address 0x4 - core index']
  #allocation1 [shape = 'u32[144,128]{1,0:T(1,128)}', space=vmem, size = 0x12000, scoped, tag = 'internal scratch']
  #allocation2 [shape = 'f32[1]{0:T(128)S(6)}', space=smem, size = 0x200, scoped, tag = 'scoped memory for tpu_custom_call.1']
  %s0 = inlined_call_operand.hbm [shape: f32[2,16,256], index: 0, kind: input, shape index: {}]
  %s1 = inlined_call_operand.vmem [shape: f32[2,16], index: 1, kind: input, shape index: {}]
  %s2 = inlined_call_operand.vmem [shape: f32[2,1], index: 2, kind: input, shape index: {}]
  %s3 = inlined_call_operand.vmem [shape: f32[16,2], index: 3, kind: input, shape index: {}]
  %s4 = inlined_call_operand.vmem [shape: f32[16,1], index: 4, kind: input, shape index: {}]
  %s5 = inlined_call_operand.hbm [shape: f32[49,512], index: 5, kind: input, shape index: {}]
  %s6 = inlined_call_operand.<no memory space> [shape: f32[1], index: 6, kind: input, shape index: {}]
  %s7 = inlined_call_operand.hbm [shape: f32[2,16,256], index: 7, kind: output, shape index: {}]
  %s8 = sld [smem:[#allocation0]]
  $region69: #{tpu_custom_call.1} parent=0
    _
  %s10 = ssub.s32 1, %s8
  %s11 = scalar_select 0, %s10, %s8
  %12 = sst [smem:[#allocation2]] %s6
  $region1: #{tpu_custom_call.1} parent=0
    #allocation3 [shape = 'u8[32768]{0}', space=vmem, size = 0x8000, scoped, tag = 'input window, operand 0']
    #allocation4 [shape = 's32[2]{0}', space=sflag, size = 0x8, scoped, tag = 'scoped memory for tpu_custom_call.1']
    #allocation5 [shape = 's32[2]{0}', space=sflag, size = 0x8, scoped, tag = 'scoped memory for tpu_custom_call.1']
    #allocation6 [shape = 'u8[114688]{0}', space=vmem, size = 0x1c000, scoped, tag = 'input window, operand 5, single buffered']
    #allocation7 [shape = 's32[1]{0}', space=sflag, size = 0x4, scoped, tag = 'scoped memory for tpu_custom_call.1']
    #allocation8 [shape = 'u8[32768]{0}', space=vmem, size = 0x8000, scoped, tag = 'output window, operand 0']
    %13 = vsyncpa [#allocation4], 0
    %s14 = scalar_lea.sflag [#allocation4], 1
    %15 = vsyncpa %s14, 0
    %16 = vsyncpa [#allocation7], 0
    %17 = vsyncpa [#allocation5], 0
    %s18 = scalar_lea.sflag [#allocation5], 1
    %19 = vsyncpa %s18, 0
    loop: start=0, step=1, limit=4
    $region2: #{tpu_custom_call.1} parent=1 // loop_pre_header
      _
    $region3: #{tpu_custom_call.1} parent=1 // loop_header
      %s21 = sphi 0, %s25
      %p22 = scmp.ge.s32.totalorder %s21, 4
      %s31 = sphi 0, %s33
      %s34 = sphi 0, %s31
      %s35 = sphi 0, %s34
      %s51 = sphi 0, %s35
      %s55 = sphi 0, %s55
      %s57 = sphi 0, %s55
      %s58 = sphi 0, %s57
      %s72 = sphi 0, %s58
      %s76 = sphi 0, %s76
      %s78 = sphi 0, %s76
      %s79 = sphi 0, %s78
      %s93 = sphi 0, %s79
      %s97 = sphi 0, %s97
      %s99 = sphi 0, %s97
      %s100 = sphi 0, %s99
      %s114 = sphi 0, %s100
      %s118 = sphi 0, %s118
      %s120 = sphi 0, %s118
      %s121 = sphi 0, %s120
      %s135 = sphi 0, %s121
      %s139 = sphi 0, %s139
      %s141 = sphi 0, %s139
      %s142 = sphi 0, %s141
      %s156 = sphi 0, %s142
      %s160 = sphi 0, %s160
      %s162 = sphi 0, %s160
      %s163 = sphi 0, %s162
      %s177 = sphi 0, %s163
      %s183 = sphi 0, %s185
      %s186 = sphi 0, %s183
      %s187 = sphi 0, %s186
      %s203 = sphi 0, %s187
    $region4: #{tpu_custom_call.1} parent=1 // loop_header_branch
      %24 = sbr.rel (%p22) target = $region8
    $region5: #{tpu_custom_call.1} parent=1 // loop_body
      %s26 = ssub.s32 %s21, 1
      %s27 = ssub.s32 %s21, 2
      %s28 = sadd.s32 %s21, 1
      %s29 = ssub.s32 %s21, %s28
      %p30 = scmp.eq.s32.totalorder %s29, 0
      %s32 = sadd.s32 %s31, 1
      %s33 = scalar_select %p30, %s31, %s32
      %p36 = pneg %p30
      %p37 = scmp.eq.s32.totalorder %s21, 1
      %p38 = por %p36, %p37
      %p39 = scmp.ne.s32.totalorder %s31, %s34
      %p40 = scmp.eq.s32.totalorder %s21, 0
      %p41 = por %p39, %p40
      %p42 = scmp.ne.s32.totalorder %s31, %s34
      %p43 = scmp.eq.s32.totalorder %s26, 1
      %p44 = por %p42, %p43
      %p45 = scmp.ne.s32.totalorder %s34, %s35
      %p46 = scmp.eq.s32.totalorder %s26, 0
      %p47 = por %p45, %p46
      %p48 = scmp.ne.s32.totalorder %s34, %s35
      %p49 = scmp.eq.s32.totalorder %s27, 1
      %p50 = por %p48, %p49
      %p52 = scmp.ne.s32.totalorder %s35, %s51
      %p53 = scmp.eq.s32.totalorder %s27, 0
      %p54 = por %p52, %p53
      %s56 = sadd.s32 %s55, 1
      %p59 = scmp.eq.s32.totalorder %s21, 1
      %p60 = scmp.ne.s32.totalorder %s55, %s57
      %p61 = scmp.eq.s32.totalorder %s21, 0
      %p62 = por %p60, %p61
      %p63 = scmp.ne.s32.totalorder %s55, %s57
      %p64 = scmp.eq.s32.totalorder %s26, 1
      %p65 = por %p63, %p64
      %p66 = scmp.ne.s32.totalorder %s57, %s58
      %p67 = scmp.eq.s32.totalorder %s26, 0
      %p68 = por %p66, %p67
      %p69 = scmp.ne.s32.totalorder %s57, %s58
      %p70 = scmp.eq.s32.totalorder %s27, 1
      %p71 = por %p69, %p70
      %p73 = scmp.ne.s32.totalorder %s58, %s72
      %p74 = scmp.eq.s32.totalorder %s27, 0
      %p75 = por %p73, %p74
      %s77 = sadd.s32 %s76, 1
      %p80 = scmp.eq.s32.totalorder %s21, 1
      %p81 = scmp.ne.s32.totalorder %s76, %s78
      %p82 = scmp.eq.s32.totalorder %s21, 0
      %p83 = por %p81, %p82
      %p84 = scmp.ne.s32.totalorder %s76, %s78
      %p85 = scmp.eq.s32.totalorder %s26, 1
      %p86 = por %p84, %p85
      %p87 = scmp.ne.s32.totalorder %s78, %s79
      %p88 = scmp.eq.s32.totalorder %s26, 0
      %p89 = por %p87, %p88
      %p90 = scmp.ne.s32.totalorder %s78, %s79
      %p91 = scmp.eq.s32.totalorder %s27, 1
      %p92 = por %p90, %p91
      %p94 = scmp.ne.s32.totalorder %s79, %s93
      %p95 = scmp.eq.s32.totalorder %s27, 0
      %p96 = por %p94, %p95
      %s98 = sadd.s32 %s97, 1
      %p101 = scmp.eq.s32.totalorder %s21, 1
      %p102 = scmp.ne.s32.totalorder %s97, %s99
      %p103 = scmp.eq.s32.totalorder %s21, 0
      %p104 = por %p102, %p103
      %p105 = scmp.ne.s32.totalorder %s97, %s99
      %p106 = scmp.eq.s32.totalorder %s26, 1
      %p107 = por %p105, %p106
      %p108 = scmp.ne.s32.totalorder %s99, %s100
      %p109 = scmp.eq.s32.totalorder %s26, 0
      %p110 = por %p108, %p109
      %p111 = scmp.ne.s32.totalorder %s99, %s100
      %p112 = scmp.eq.s32.totalorder %s27, 1
      %p113 = por %p111, %p112
      %p115 = scmp.ne.s32.totalorder %s100, %s114
      %p116 = scmp.eq.s32.totalorder %s27, 0
      %p117 = por %p115, %p116
      %s119 = sadd.s32 %s118, 1
      %p122 = scmp.eq.s32.totalorder %s21, 1
      %p123 = scmp.ne.s32.totalorder %s118, %s120
      %p124 = scmp.eq.s32.totalorder %s21, 0
      %p125 = por %p123, %p124
      %p126 = scmp.ne.s32.totalorder %s118, %s120
      %p127 = scmp.eq.s32.totalorder %s26, 1
      %p128 = por %p126, %p127
      %p129 = scmp.ne.s32.totalorder %s120, %s121
      %p130 = scmp.eq.s32.totalorder %s26, 0
      %p131 = por %p129, %p130
      %p132 = scmp.ne.s32.totalorder %s120, %s121
      %p133 = scmp.eq.s32.totalorder %s27, 1
      %p134 = por %p132, %p133
      %p136 = scmp.ne.s32.totalorder %s121, %s135
      %p137 = scmp.eq.s32.totalorder %s27, 0
      %p138 = por %p136, %p137
      %s140 = sadd.s32 %s139, 1
      %p143 = scmp.eq.s32.totalorder %s21, 1
      %p144 = scmp.ne.s32.totalorder %s139, %s141
      %p145 = scmp.eq.s32.totalorder %s21, 0
      %p146 = por %p144, %p145
      %p147 = scmp.ne.s32.totalorder %s139, %s141
      %p148 = scmp.eq.s32.totalorder %s26, 1
      %p149 = por %p147, %p148
      %p150 = scmp.ne.s32.totalorder %s141, %s142
      %p151 = scmp.eq.s32.totalorder %s26, 0
      %p152 = por %p150, %p151
      %p153 = scmp.ne.s32.totalorder %s141, %s142
      %p154 = scmp.eq.s32.totalorder %s27, 1
      %p155 = por %p153, %p154
      %p157 = scmp.ne.s32.totalorder %s142, %s156
      %p158 = scmp.eq.s32.totalorder %s27, 0
      %p159 = por %p157, %p158
      %s161 = sadd.s32 %s160, 1
      %p164 = scmp.eq.s32.totalorder %s21, 1
      %p165 = scmp.ne.s32.totalorder %s160, %s162
      %p166 = scmp.eq.s32.totalorder %s21, 0
      %p167 = por %p165, %p166
      %p168 = scmp.ne.s32.totalorder %s160, %s162
      %p169 = scmp.eq.s32.totalorder %s26, 1
      %p170 = por %p168, %p169
      %p171 = scmp.ne.s32.totalorder %s162, %s163
      %p172 = scmp.eq.s32.totalorder %s26, 0
      %p173 = por %p171, %p172
      %p174 = scmp.ne.s32.totalorder %s162, %s163
      %p175 = scmp.eq.s32.totalorder %s27, 1
      %p176 = por %p174, %p175
      %p178 = scmp.ne.s32.totalorder %s163, %s177
      %p179 = scmp.eq.s32.totalorder %s27, 0
      %p180 = por %p178, %p179
      %s181 = ssub.s32 %s21, %s28
      %p182 = scmp.eq.s32.totalorder %s181, 0
      %s184 = sadd.s32 %s183, 1
      %s185 = scalar_select %p182, %s183, %s184
      %p188 = pneg %p182
      %p189 = scmp.eq.s32.totalorder %s21, 1
      %p190 = por %p188, %p189
      %p191 = scmp.ne.s32.totalorder %s183, %s186
      %p192 = scmp.eq.s32.totalorder %s21, 0
      %p193 = por %p191, %p192
      %p194 = scmp.ne.s32.totalorder %s183, %s186
      %p195 = scmp.eq.s32.totalorder %s26, 1
      %p196 = por %p194, %p195
      %p197 = scmp.ne.s32.totalorder %s186, %s187
      %p198 = scmp.eq.s32.totalorder %s26, 0
      %p199 = por %p197, %p198
      %p200 = scmp.ne.s32.totalorder %s186, %s187
      %p201 = scmp.eq.s32.totalorder %s27, 1
      %p202 = por %p200, %p201
      %p204 = scmp.ne.s32.totalorder %s187, %s203
      %p205 = scmp.eq.s32.totalorder %s27, 0
      %p206 = por %p204, %p205
      %p207 = scmp.le.s32.totalorder 1, %s21
      %p208 = scmp.lt.s32.totalorder %s21, 3
      %p209 = pnand %p207, %p208
      %p210 = pneg %p209
      // Predicated region
      $region9: #{tpu_custom_call.1} parent=5 // pred_check
        _
      $region10: #{tpu_custom_call.1} parent=5 // pred_check_branch
        %212 = sbr.rel (%p209) target = $region12
      $region11: #{tpu_custom_call.1} parent=5 // pred_region
        %s213 = ssub.s32 %s21, 1
        // Predicated region
        $region13: #{tpu_custom_call.1} parent=11 // pred_check
          %p214 = pneg %p68
        $region14: #{tpu_custom_call.1} parent=11 // pred_check_branch
          %216 = sbr.rel (%p214) target = $region16
        $region15: #{tpu_custom_call.1} parent=11 // pred_region
          _
        $region16: #{tpu_custom_call.1} parent=11 // pred_fallthru
          _
        // Predicated region
        $region17: #{tpu_custom_call.1} parent=11 // pred_check
          %p217 = pneg %p89
        $region18: #{tpu_custom_call.1} parent=11 // pred_check_branch
          %219 = sbr.rel (%p217) target = $region20
        $region19: #{tpu_custom_call.1} parent=11 // pred_region
          _
        $region20: #{tpu_custom_call.1} parent=11 // pred_fallthru
          _
        // Predicated region
        $region21: #{tpu_custom_call.1} parent=11 // pred_check
          %p220 = pneg %p110
        $region22: #{tpu_custom_call.1} parent=11 // pred_check_branch
          %222 = sbr.rel (%p220) target = $region24
        $region23: #{tpu_custom_call.1} parent=11 // pred_region
          _
        $region24: #{tpu_custom_call.1} parent=11 // pred_fallthru
          _
        // Predicated region
        $region25: #{tpu_custom_call.1} parent=11 // pred_check
          %p223 = pneg %p131
        $region26: #{tpu_custom_call.1} parent=11 // pred_check_branch
          %225 = sbr.rel (%p223) target = $region28
        $region27: #{tpu_custom_call.1} parent=11 // pred_region
          _
        $region28: #{tpu_custom_call.1} parent=11 // pred_fallthru
          _
        // Predicated region
        $region29: #{tpu_custom_call.1} parent=11 // pred_check
          %p226 = pneg %p152
        $region30: #{tpu_custom_call.1} parent=11 // pred_check_branch
          %228 = sbr.rel (%p226) target = $region32
        $region31: #{tpu_custom_call.1} parent=11 // pred_region
          %s230 = ssub.s32 3584, 3584
          %231 = vsyncadd [#allocation7], %s230
          %s232 = sshll.u32 [#allocation6], 4
          %s233 = int_to_ptr.vmem [resolvable:$true] %s232
          %238 = dma.hbm_to_vmem [thread:$0]  %s5, 3584, %s233, [#allocation7], 512, 512, 32
        $region32: #{tpu_custom_call.1} parent=11 // pred_fallthru
          _
        // Predicated region
        $region33: #{tpu_custom_call.1} parent=11 // pred_check
          %p239 = pneg %p173
        $region34: #{tpu_custom_call.1} parent=11 // pred_check_branch
          %241 = sbr.rel (%p239) target = $region36
        $region35: #{tpu_custom_call.1} parent=11 // pred_region
          _
        $region36: #{tpu_custom_call.1} parent=11 // pred_fallthru
          _
      $region12: #{tpu_custom_call.1} parent=5 // pred_fallthru
        _
      %p242 = scmp.lt.s32.totalorder %s21, 2
      // Predicated region
      $region37: #{tpu_custom_call.1} parent=5 // pred_check
        %p243 = pneg %p242
      $region38: #{tpu_custom_call.1} parent=5 // pred_check_branch
        %245 = sbr.rel (%p243) target = $region40
      $region39: #{tpu_custom_call.1} parent=5 // pred_region
        // Predicated region
        $region41: #{tpu_custom_call.1} parent=39 // pred_check
          %p246 = pneg %p41
        $region42: #{tpu_custom_call.1} parent=39 // pred_check_branch
          %248 = sbr.rel (%p246) target = $region44
        $region43: #{tpu_custom_call.1} parent=39 // pred_region
          %s249 = sand.u32 %s31, 1
          %s250 = scalar_lea.sflag [#allocation4], %s249
          %s251 = sand.u32 %s31, 1
          %s252 = smul.addr %s251, 32
          %s253 = scalar_lea.vmem [#allocation3], %s252
          %s255 = ssub.s32 512, 512
          %256 = vsyncadd %s250, %s255
          %s257 = smul.addr %s21, 4
          %s258 = smul.addr %s257, 128
          %s259 = scalar_lea.hbm %s0, %s258
          %s260 = sshll.u32 %s253, 4
          %s261 = int_to_ptr.vmem [resolvable:$true] %s260
          %266 = dma.hbm_to_vmem [thread:$0]  %s259, 512, %s261, %s250, 256, 256, 16
        $region44: #{tpu_custom_call.1} parent=39 // pred_fallthru
          _
      $region40: #{tpu_custom_call.1} parent=5 // pred_fallthru
        _
      %p267 = scmp.le.s32.totalorder 1, %s21
      %p268 = scmp.lt.s32.totalorder %s21, 3
      %p269 = pnand %p267, %p268
      %p270 = pneg %p269
      // Predicated region
      $region45: #{tpu_custom_call.1} parent=5 // pred_check
        _
      $region46: #{tpu_custom_call.1} parent=5 // pred_check_branch
        %272 = sbr.rel (%p269) target = $region48
      $region47: #{tpu_custom_call.1} parent=5 // pred_region
        %s273 = ssub.s32 %s21, 1
        %s274 = sand.u32 %s34, 1
        %s275 = scalar_lea.sflag [#allocation4], %s274
        %s276 = sand.u32 %s34, 1
        %s277 = smul.addr %s276, 32
        %s278 = scalar_lea.vmem [#allocation3], %s277
        // Predicated region
        $region49: #{tpu_custom_call.1} parent=47 // pred_check
          %p279 = pneg %p47
        $region50: #{tpu_custom_call.1} parent=47 // pred_check_branch
          %281 = sbr.rel (%p279) target = $region52
        $region51: #{tpu_custom_call.1} parent=47 // pred_region
          %282 = dma.done %s275, 512
        $region52: #{tpu_custom_call.1} parent=47 // pred_fallthru
          _
        // Predicated region
        $region53: #{tpu_custom_call.1} parent=47 // pred_check
          %p283 = pneg %p152
        $region54: #{tpu_custom_call.1} parent=47 // pred_check_branch
          %285 = sbr.rel (%p283) target = $region56
        $region55: #{tpu_custom_call.1} parent=47 // pred_region
          %286 = dma.done [#allocation7], 3584
        $region56: #{tpu_custom_call.1} parent=47 // pred_fallthru
          _
        %s287 = sand.u32 %s34, 1
        %s288 = scalar_lea.sflag [#allocation4], %s287
        %s289 = sand.u32 %s34, 1
        %s290 = smul.addr %s289, 32
        %s291 = scalar_lea.vmem [#allocation3], %s290
        %p292 = pneg %p47
        %p293 = pneg %p44
        %p294 = pneg %p68
        %p295 = pneg %p65
        %p296 = pneg %p89
        %p297 = pneg %p86
        %p298 = pneg %p110
        %p299 = pneg %p107
        %p300 = pneg %p131
        %p301 = pneg %p128
        %p302 = pneg %p152
        %p303 = pneg %p149
        %p304 = pneg %p173
        %p305 = pneg %p170
        %p306 = pneg %p199
        %p307 = pneg %p196
        %s308 = sand.u32 %s186, 1
        %s309 = scalar_lea.sflag [#allocation5], %s308
        %s310 = sand.u32 %s186, 1
        %s311 = smul.addr %s310, 32
        %s312 = scalar_lea.vmem [#allocation8], %s311
        %v314 = vld [vmem:[%s278] sm:$0xff]
        %v315 = vld [vmem:[%s278 + $0x8] sm:$0xff]
        %v316 = vld [vmem:[%s278 + $0x10] sm:$0xff]
        %v317 = vld [vmem:[%s278 + $0x18] sm:$0xff]
        %v318 = vadd.f32 %v314, %v315
        %319 = vadd.xlane.f32.xlu0 %v318
        %v320 = vpop.xlane.xlu0 %319
        %v321 = vadd.f32 %v316, %v317
        %322 = vadd.xlane.f32.xlu0 %v321
        %v323 = vpop.xlane.xlu0 %322
        %v324 = vmul.f32 %v320, 0.00390625
        %v325 = vmul.f32 %v323, 0.00390625
        %v326 = vmax.f32 %v314, %v315
        %327 = vmax.xlane.f32.xlu0 %v326
        %v328 = vpop.xlane.xlu0 %327
        %v329 = vmax.f32 %v316, %v317
        %330 = vmax.xlane.f32.xlu0 %v329
        %v331 = vpop.xlane.xlu0 %330
        %v332 = vlaneseq
        %v333 = vand.u32 %v332, 127
        %vm334 = vcmp.eq.s32.totalorder %v333, 0
        %v335 = vsel %vm334, %v324, %v328
        %v336 = vsel %vm334, %v325, %v331
        %v337 = vld [vmem:[%s1] sm:$0x3]
        %v338 = vpack.c.bf16 %v337, %v337
        %v339 = vpack.c.bf16 %v336, %v335
        %v340 = vld [vmem:[%s2] sm:$0x3]
        %342 = vset.pattern.permute.xlu0 0
        %343 = vperm.xlu0 %342, %v340
        %v344 = vpop.permute.xlu0 %343
        %vm346 = vcmask 130048
        %v348 = vsel %vm346, %v338, 0
        %350 = vmatprep.subr.bf16.mxu0 0
        %351 = vmatpush1.bf16.msra.mxu0 0
        %352 = vmatprep.subr.bf16.mxu0 0
        %353 = vmatpush1.bf16.msra.mxu0 0
        %354 = vmatprep.subr.bf16.mxu0 0
        %355 = vmatpush1.bf16.msra.mxu0 0
        %356 = vmatprep.subr.bf16.mxu0 0
        %357 = vmatpush1.bf16.msra.mxu0 0
        %358 = vmatprep.subr.bf16.mxu0 0
        %359 = vmatpush1.bf16.msra.mxu0 0
        %360 = vmatprep.subr.bf16.mxu0 0
        %361 = vmatpush1.bf16.msra.mxu0 0
        %362 = vmatprep.subr.bf16.mxu0 0
        %363 = vmatpush1.bf16.msra.mxu0 0
        %364 = vmatprep.subr.bf16.mxu0 0
        %365 = vmatpush1.bf16.msra.mxu0 %v339
        %366 = vmatprep.subr.bf16.mxu0 0
        %367 = vmatpush2.bf16.msra.mxu0 0
        %368 = vmatprep.subr.bf16.mxu0 0
        %369 = vmatpush2.bf16.msra.mxu0 0
        %370 = vmatprep.subr.bf16.mxu0 0
        %371 = vmatpush2.bf16.msra.mxu0 0
        %372 = vmatprep.subr.bf16.mxu0 0
        %373 = vmatpush2.bf16.msra.mxu0 0
        %374 = vmatprep.subr.bf16.mxu0 0
        %375 = vmatpush2.bf16.msra.mxu0 0
        %376 = vmatprep.subr.bf16.mxu0 0
        %377 = vmatpush2.bf16.msra.mxu0 0
        %378 = vmatprep.subr.bf16.mxu0 0
        %379 = vmatpush2.bf16.msra.mxu0 0
        %380 = vmatprep.subr.bf16.mxu0 0
        %381 = vmatpush2.bf16.msra.mxu0 0
        %382 = vmatprep.mubr.bf16.mxu0 0
        %383 = vmatmul.mubr.bf16.gmra.mxu0 %v348
        %v384 = vpop.f32.mrf.mxu0
        %v385 = vadd.f32 %v344, %v384
        %v386 = vpop.f32.mrf.mxu0
        %v387 = vpop.f32.mrf.mxu0
        %v388 = vpop.f32.mrf.mxu0
        %389 = vdwg.mxu0
        %v390 = vmax.f32 %v385, 0.0
        %v391 = vld [vmem:[%s3] sm:$0xff]
        %v392 = vld [vmem:[%s3 + $0x8] sm:$0xff]
        %v393 = vpack.c.bf16 %v392, %v391
        %v394 = vpack.c.bf16 %v390, %v390
        %v395 = vld [vmem:[%s4] sm:$0xff]
        %v396 = vld [vmem:[%s4 + $0x8] sm:$0xff]
        %398 = vset.pattern.permute.xlu0 0
        %399 = vperm.xlu0 %398, %v395
        %v400 = vpop.permute.xlu0 %399
        %403 = vset.pattern.permute.xlu0 0
        %404 = vperm.xlu0 %403, %v396
        %v405 = vpop.permute.xlu0 %404
        %vm407 = vcmask 15360
        %v409 = vsel %vm407, %v393, 0
        %vm411 = vcmask 1040384
        %v413 = vsel %vm411, %v394, 0
        %415 = vmatprep.subr.bf16.mxu0 0
        %416 = vmatpush1.bf16.msra.mxu0 0
        %417 = vmatprep.subr.bf16.mxu0 0
        %418 = vmatpush1.bf16.msra.mxu0 0
        %419 = vmatprep.subr.bf16.mxu0 0
        %420 = vmatpush1.bf16.msra.mxu0 0
        %421 = vmatprep.subr.bf16.mxu0 0
        %422 = vmatpush1.bf16.msra.mxu0 0
        %423 = vmatprep.subr.bf16.mxu0 0
        %424 = vmatpush1.bf16.msra.mxu0 0
        %425 = vmatprep.subr.bf16.mxu0 0
        %426 = vmatpush1.bf16.msra.mxu0 0
        %427 = vmatprep.subr.bf16.mxu0 0
        %428 = vmatpush1.bf16.msra.mxu0 0
        %429 = vmatprep.subr.bf16.mxu0 0
        %430 = vmatpush1.bf16.msra.mxu0 %v413
        %431 = vmatprep.subr.bf16.mxu0 0
        %432 = vmatpush2.bf16.msra.mxu0 0
        %433 = vmatprep.subr.bf16.mxu0 0
        %434 = vmatpush2.bf16.msra.mxu0 0
        %435 = vmatprep.subr.bf16.mxu0 0
        %436 = vmatpush2.bf16.msra.mxu0 0
        %437 = vmatprep.subr.bf16.mxu0 0
        %438 = vmatpush2.bf16.msra.mxu0 0
        %439 = vmatprep.subr.bf16.mxu0 0
        %440 = vmatpush2.bf16.msra.mxu0 0
        %441 = vmatprep.subr.bf16.mxu0 0
        %442 = vmatpush2.bf16.msra.mxu0 0
        %443 = vmatprep.subr.bf16.mxu0 0
        %444 = vmatpush2.bf16.msra.mxu0 0
        %445 = vmatprep.subr.bf16.mxu0 0
        %446 = vmatpush2.bf16.msra.mxu0 0
        %447 = vmatprep.mubr.bf16.mxu0 0
        %448 = vmatmul.mubr.bf16.gmra.mxu0 %v409
        %v449 = vpop.f32.mrf.mxu0
        %v450 = vadd.f32 %v400, %v449
        %v451 = vpop.f32.mrf.mxu0
        %v452 = vpop.f32.mrf.mxu0
        %v453 = vadd.f32 %v405, %v452
        %v454 = vpop.f32.mrf.mxu0
        %455 = vdwg.mxu0
        %458 = vrot.lane.b32.xlu0 %v450, 127
        %v459 = vpop.permute.xlu0 %458
        %460 = vrot.lane.b32.xlu0 %v453, 127
        %v461 = vpop.permute.xlu0 %460
        %v464 = vadd.f32 %v450, %v459
        %v465 = vadd.f32 %v453, %v461
        %v466 = vxor.u32 %v464, 2147483648
        %v467 = vxor.u32 %v465, 2147483648
        %v468 = vmul.f32 %v466, 1.442695
        %v469 = vpow.pop %v468
        %v470 = vmul.f32 %v467, 1.442695
        %v471 = vpow.pop %v470
        %v472 = vadd.f32 %v469, 1.0
        %v473 = vadd.f32 %v471, 1.0
        %v474 = vrcp.pop %v472
        %v475 = vmul.f32 1.0, %v474
        %v476 = vrcp.pop %v473
        %v477 = vmul.f32 1.0, %v476
        %479 = vset.pattern.permute.xlu0 0
        %480 = vperm.xlu0 %479, %v475
        %v481 = vpop.permute.xlu0 %480
        %484 = vset.pattern.permute.xlu0 0
        %485 = vperm.xlu0 %484, %v477
        %v486 = vpop.permute.xlu0 %485
        %v488 = vmul.f32 %v314, %v481
        %v489 = vmul.f32 %v315, %v481
        %v490 = vmul.f32 %v316, %v486
        %v491 = vmul.f32 %v317, %v486
        %492 = vst [vmem:[%s312] sm:$0xff] %v488
        %493 = vst [vmem:[%s312 + $0x8] sm:$0xff] %v489
        %494 = vst [vmem:[%s312 + $0x10] sm:$0xff] %v490
        %495 = vst [vmem:[%s312 + $0x18] sm:$0xff] %v491
        %v496 = vld [vmem:[%s312] sm:$0xff]
        %v497 = vld [vmem:[%s312 + $0x8] sm:$0xff]
        %v498 = vld [vmem:[%s312 + $0x10] sm:$0xff]
        %v499 = vld [vmem:[%s312 + $0x18] sm:$0xff]
        %v500 = vadd.f32 %v496, %v498
        %v501 = vrot.slane %v500, 4
        %v502 = vadd.f32 %v500, %v501
        %v503 = vrot.slane %v502, 2
        %v504 = vadd.f32 %v502, %v503
        %v505 = vrot.slane %v504, 1
        %v506 = vadd.f32 %v504, %v505
        %v507 = vadd.f32 %v497, %v499
        %v508 = vrot.slane %v507, 4
        %v509 = vadd.f32 %v507, %v508
        %v510 = vrot.slane %v509, 2
        %v511 = vadd.f32 %v509, %v510
        %v512 = vrot.slane %v511, 1
        %v513 = vadd.f32 %v511, %v512
        %v514 = vrcp.pop 16.0
        %v515 = vmul.f32 %v506, %v514
        %v516 = vmul.f32 %v513, %v514
        %v517 = vmax.f32 %v496, %v498
        %v518 = vrot.slane %v517, 4
        %v519 = vmax.f32 %v517, %v518
        %v520 = vrot.slane %v519, 2
        %v521 = vmax.f32 %v519, %v520
        %v522 = vrot.slane %v521, 1
        %v523 = vmax.f32 %v521, %v522
        %v524 = vmax.f32 %v497, %v499
        %v525 = vrot.slane %v524, 4
        %v526 = vmax.f32 %v524, %v525
        %v527 = vrot.slane %v526, 2
        %v528 = vmax.f32 %v526, %v527
        %v529 = vrot.slane %v528, 1
        %v530 = vmax.f32 %v528, %v529
        %531 = vrot.lane.b32.xlu0 %v515, 51
        %v532 = vpop.permute.xlu0 %531
        %533 = vrot.lane.b32.xlu0 %v516, 51
        %v534 = vpop.permute.xlu0 %533
        %535 = vrot.lane.b32.xlu0 %v523, 51
        %v536 = vpop.permute.xlu0 %535
        %537 = vrot.lane.b32.xlu0 %v530, 51
        %v538 = vpop.permute.xlu0 %537
        %vm539 = vcmp.lt.s32.totalorder %v333, 51
        %v540 = vsel %vm539, %v536, %v538
        %v541 = vsel %vm539, %v534, %v536
        %v542 = vsel %vm539, %v532, %v534
        %v543 = vsel %vm539, %v538, %v532
        %v544 = vld [vmem:[#allocation6] ss:$8 sm:$0xf]
        %v549 = vcombine.low %v543, %v542
        %v550 = vcombine.low %v541, %v540
        %v552 = vunpack.c.l.s4 1966171168
        %v553 = vunpack.c.0.s8 %v552
        %v554 = vlaneseq
        %v555 = vshrl.u32 %v554, 7
        %v556 = vsub.s32 %v553, %v555
        %v557 = vrot.slane %v549, %v556
        %v559 = vunpack.c.l.s4 1966171168
        %v560 = vunpack.c.0.s8 %v559
        %v561 = vlaneseq
        %v562 = vshrl.u32 %v561, 7
        %v563 = vsub.s32 %v560, %v562
        %v564 = vrot.slane %v550, %v563
        %v565 = vcombine.low %v557, %v564
        %v567 = vunpack.c.l.s4 1966171168
        %v568 = vunpack.c.0.s8 %v567
        %v569 = vlaneseq
        %v570 = vshrl.u32 %v569, 7
        %v571 = vsub.s32 %v568, %v570
        %v572 = vrot.slane %v565, %v571
        %v574 = vmul.f32 %v544, %v572
        %v575 = vadd.f32 %v574, 0.0
        %576 = vrot.lane.b32.xlu0 %v515, 50
        %v577 = vpop.permute.xlu0 %576
        %578 = vrot.lane.b32.xlu0 %v516, 50
        %v579 = vpop.permute.xlu0 %578
        %580 = vrot.lane.b32.xlu0 %v523, 50
        %v581 = vpop.permute.xlu0 %580
        %582 = vrot.lane.b32.xlu0 %v530, 50
        %v583 = vpop.permute.xlu0 %582
        %vm584 = vcmp.lt.s32.totalorder %v333, 50
        %v585 = vsel %vm584, %v581, %v583
        %v586 = vsel %vm584, %v579, %v581
        %v587 = vsel %vm584, %v577, %v579
        %v588 = vsel %vm584, %v583, %v577
        %s589 = scalar_lea.vmem [#allocation6], 1
        %v590 = vld [vmem:[%s589] ss:$8 sm:$0xf]
        %v595 = vcombine.low %v588, %v587
        %v596 = vcombine.low %v586, %v585
        %v598 = vunpack.c.l.s4 1966171168
        %v599 = vunpack.c.0.s8 %v598
        %v600 = vlaneseq
        %v601 = vshrl.u32 %v600, 7
        %v602 = vsub.s32 %v599, %v601
        %v603 = vrot.slane %v595, %v602
        %v605 = vunpack.c.l.s4 1966171168
        %v606 = vunpack.c.0.s8 %v605
        %v607 = vlaneseq
        %v608 = vshrl.u32 %v607, 7
        %v609 = vsub.s32 %v606, %v608
        %v610 = vrot.slane %v596, %v609
        %v611 = vcombine.low %v603, %v610
        %v613 = vunpack.c.l.s4 1966171168
        %v614 = vunpack.c.0.s8 %v613
        %v615 = vlaneseq
        %v616 = vshrl.u32 %v615, 7
        %v617 = vsub.s32 %v614, %v616
        %v618 = vrot.slane %v611, %v617
        %v620 = vmul.f32 %v590, %v618
        %v621 = vadd.f32 %v575, %v620
        %622 = vrot.lane.b32.xlu0 %v515, 49
        %v623 = vpop.permute.xlu0 %622
        %624 = vrot.lane.b32.xlu0 %v516, 49
        %v625 = vpop.permute.xlu0 %624
        %626 = vrot.lane.b32.xlu0 %v523, 49
        %v627 = vpop.permute.xlu0 %626
        %628 = vrot.lane.b32.xlu0 %v530, 49
        %v629 = vpop.permute.xlu0 %628
        %vm630 = vcmp.lt.s32.totalorder %v333, 49
        %v631 = vsel %vm630, %v627, %v629
        %v632 = vsel %vm630, %v625, %v627
        %v633 = vsel %vm630, %v623, %v625
        %v634 = vsel %vm630, %v629, %v623
        %s635 = scalar_lea.vmem [#allocation6], 2
        %v636 = vld [vmem:[%s635] ss:$8 sm:$0xf]
        %v641 = vcombine.low %v634, %v633
        %v642 = vcombine.low %v632, %v631
        %v644 = vunpack.c.l.s4 1966171168
        %v645 = vunpack.c.0.s8 %v644
        %v646 = vlaneseq
        %v647 = vshrl.u32 %v646, 7
        %v648 = vsub.s32 %v645, %v647
        %v649 = vrot.slane %v641, %v648
        %v651 = vunpack.c.l.s4 1966171168
        %v652 = vunpack.c.0.s8 %v651
        %v653 = vlaneseq
        %v654 = vshrl.u32 %v653, 7
        %v655 = vsub.s32 %v652, %v654
        %v656 = vrot.slane %v642, %v655
        %v657 = vcombine.low %v649, %v656
        %v659 = vunpack.c.l.s4 1966171168
        %v660 = vunpack.c.0.s8 %v659
        %v661 = vlaneseq
        %v662 = vshrl.u32 %v661, 7
        %v663 = vsub.s32 %v660, %v662
        %v664 = vrot.slane %v657, %v663
        %v666 = vmul.f32 %v636, %v664
        %v667 = vadd.f32 %v621, %v666
        %668 = vrot.lane.b32.xlu0 %v515, 48
        %v669 = vpop.permute.xlu0 %668
        %670 = vrot.lane.b32.xlu0 %v516, 48
        %v671 = vpop.permute.xlu0 %670
        %672 = vrot.lane.b32.xlu0 %v523, 48
        %v673 = vpop.permute.xlu0 %672
        %674 = vrot.lane.b32.xlu0 %v530, 48
        %v675 = vpop.permute.xlu0 %674
        %vm676 = vcmp.lt.s32.totalorder %v333, 48
        %v677 = vsel %vm676, %v673, %v675
        %v678 = vsel %vm676, %v671, %v673
        %v679 = vsel %vm676, %v669, %v671
        %v680 = vsel %vm676, %v675, %v669
        %s681 = scalar_lea.vmem [#allocation6], 3
        %v682 = vld [vmem:[%s681] ss:$8 sm:$0xf]
        %v687 = vcombine.low %v680, %v679
        %v688 = vcombine.low %v678, %v677
        %v690 = vunpack.c.l.s4 1966171168
        %v691 = vunpack.c.0.s8 %v690
        %v692 = vlaneseq
        %v693 = vshrl.u32 %v692, 7
        %v694 = vsub.s32 %v691, %v693
        %v695 = vrot.slane %v687, %v694
        %v697 = vunpack.c.l.s4 1966171168
        %v698 = vunpack.c.0.s8 %v697
        %v699 = vlaneseq
        %v700 = vshrl.u32 %v699, 7
        %v701 = vsub.s32 %v698, %v700
        %v702 = vrot.slane %v688, %v701
        %v703 = vcombine.low %v695, %v702
        %v705 = vunpack.c.l.s4 1966171168
        %v706 = vunpack.c.0.s8 %v705
        %v707 = vlaneseq
        %v708 = vshrl.u32 %v707, 7
        %v709 = vsub.s32 %v706, %v708
        %v710 = vrot.slane %v703, %v709
        %v712 = vmul.f32 %v682, %v710
        %v713 = vadd.f32 %v667, %v712
        %714 = vrot.lane.b32.xlu0 %v515, 47
        %v715 = vpop.permute.xlu0 %714
        %716 = vrot.lane.b32.xlu0 %v516, 47
        %v717 = vpop.permute.xlu0 %716
        %718 = vrot.lane.b32.xlu0 %v523, 47
        %v719 = vpop.permute.xlu0 %718
        %720 = vrot.lane.b32.xlu0 %v530, 47
        %v721 = vpop.permute.xlu0 %720
        %vm722 = vcmp.lt.s32.totalorder %v333, 47
        %v723 = vsel %vm722, %v719, %v721
        %v724 = vsel %vm722, %v717, %v719
        %v725 = vsel %vm722, %v715, %v717
        %v726 = vsel %vm722, %v721, %v715
        %s727 = scalar_lea.vmem [#allocation6], 4
        %v728 = vld [vmem:[%s727] ss:$8 sm:$0xf]
        %v733 = vcombine.low %v726, %v725
        %v734 = vcombine.low %v724, %v723
        %v736 = vunpack.c.l.s4 1966171168
        %v737 = vunpack.c.0.s8 %v736
        %v738 = vlaneseq
        %v739 = vshrl.u32 %v738, 7
        %v740 = vsub.s32 %v737, %v739
        %v741 = vrot.slane %v733, %v740
        %v743 = vunpack.c.l.s4 1966171168
        %v744 = vunpack.c.0.s8 %v743
        %v745 = vlaneseq
        %v746 = vshrl.u32 %v745, 7
        %v747 = vsub.s32 %v744, %v746
        %v748 = vrot.slane %v734, %v747
        %v749 = vcombine.low %v741, %v748
        %v751 = vunpack.c.l.s4 1966171168
        %v752 = vunpack.c.0.s8 %v751
        %v753 = vlaneseq
        %v754 = vshrl.u32 %v753, 7
        %v755 = vsub.s32 %v752, %v754
        %v756 = vrot.slane %v749, %v755
        %v758 = vmul.f32 %v728, %v756
        %v759 = vadd.f32 %v713, %v758
        %760 = vrot.lane.b32.xlu0 %v515, 46
        %v761 = vpop.permute.xlu0 %760
        %762 = vrot.lane.b32.xlu0 %v516, 46
        %v763 = vpop.permute.xlu0 %762
        %764 = vrot.lane.b32.xlu0 %v523, 46
        %v765 = vpop.permute.xlu0 %764
        %766 = vrot.lane.b32.xlu0 %v530, 46
        %v767 = vpop.permute.xlu0 %766
        %vm768 = vcmp.lt.s32.totalorder %v333, 46
        %v769 = vsel %vm768, %v765, %v767
        %v770 = vsel %vm768, %v763, %v765
        %v771 = vsel %vm768, %v761, %v763
        %v772 = vsel %vm768, %v767, %v761
        %s773 = scalar_lea.vmem [#allocation6], 5
        %v774 = vld [vmem:[%s773] ss:$8 sm:$0xf]
        %v779 = vcombine.low %v772, %v771
        %v780 = vcombine.low %v770, %v769
        %v782 = vunpack.c.l.s4 1966171168
        %v783 = vunpack.c.0.s8 %v782
        %v784 = vlaneseq
        %v785 = vshrl.u32 %v784, 7
        %v786 = vsub.s32 %v783, %v785
        %v787 = vrot.slane %v779, %v786
        %v789 = vunpack.c.l.s4 1966171168
        %v790 = vunpack.c.0.s8 %v789
        %v791 = vlaneseq
        %v792 = vshrl.u32 %v791, 7
        %v793 = vsub.s32 %v790, %v792
        %v794 = vrot.slane %v780, %v793
        %v795 = vcombine.low %v787, %v794
        %v797 = vunpack.c.l.s4 1966171168
        %v798 = vunpack.c.0.s8 %v797
        %v799 = vlaneseq
        %v800 = vshrl.u32 %v799, 7
        %v801 = vsub.s32 %v798, %v800
        %v802 = vrot.slane %v795, %v801
        %v804 = vmul.f32 %v774, %v802
        %v805 = vadd.f32 %v759, %v804
        %806 = vrot.lane.b32.xlu0 %v515, 45
        %v807 = vpop.permute.xlu0 %806
        %808 = vrot.lane.b32.xlu0 %v516, 45
        %v809 = vpop.permute.xlu0 %808
        %810 = vrot.lane.b32.xlu0 %v523, 45
        %v811 = vpop.permute.xlu0 %810
        %812 = vrot.lane.b32.xlu0 %v530, 45
        %v813 = vpop.permute.xlu0 %812
        %vm814 = vcmp.lt.s32.totalorder %v333, 45
        %v815 = vsel %vm814, %v811, %v813
        %v816 = vsel %vm814, %v809, %v811
        %v817 = vsel %vm814, %v807, %v809
        %v818 = vsel %vm814, %v813, %v807
        %s819 = scalar_lea.vmem [#allocation6], 6
        %v820 = vld [vmem:[%s819] ss:$8 sm:$0xf]
        %v825 = vcombine.low %v818, %v817
        %v826 = vcombine.low %v816, %v815
        %v828 = vunpack.c.l.s4 1966171168
        %v829 = vunpack.c.0.s8 %v828
        %v830 = vlaneseq
        %v831 = vshrl.u32 %v830, 7
        %v832 = vsub.s32 %v829, %v831
        %v833 = vrot.slane %v825, %v832
        %v835 = vunpack.c.l.s4 1966171168
        %v836 = vunpack.c.0.s8 %v835
        %v837 = vlaneseq
        %v838 = vshrl.u32 %v837, 7
        %v839 = vsub.s32 %v836, %v838
        %v840 = vrot.slane %v826, %v839
        %v841 = vcombine.low %v833, %v840
        %v843 = vunpack.c.l.s4 1966171168
        %v844 = vunpack.c.0.s8 %v843
        %v845 = vlaneseq
        %v846 = vshrl.u32 %v845, 7
        %v847 = vsub.s32 %v844, %v846
        %v848 = vrot.slane %v841, %v847
        %v850 = vmul.f32 %v820, %v848
        %v851 = vadd.f32 %v805, %v850
        %852 = vrot.lane.b32.xlu0 %v515, 35
        %v853 = vpop.permute.xlu0 %852
        %854 = vrot.lane.b32.xlu0 %v516, 35
        %v855 = vpop.permute.xlu0 %854
        %856 = vrot.lane.b32.xlu0 %v523, 35
        %v857 = vpop.permute.xlu0 %856
        %858 = vrot.lane.b32.xlu0 %v530, 35
        %v859 = vpop.permute.xlu0 %858
        %vm860 = vcmp.lt.s32.totalorder %v333, 35
        %v861 = vsel %vm860, %v857, %v859
        %v862 = vsel %vm860, %v855, %v857
        %v863 = vsel %vm860, %v853, %v855
        %v864 = vsel %vm860, %v859, %v853
        %s865 = scalar_lea.vmem [#allocation6], 7
        %v866 = vld [vmem:[%s865] ss:$8 sm:$0xf]
        %v871 = vcombine.low %v864, %v863
        %v872 = vcombine.low %v862, %v861
        %v874 = vunpack.c.l.s4 1966171168
        %v875 = vunpack.c.0.s8 %v874
        %v876 = vlaneseq
        %v877 = vshrl.u32 %v876, 7
        %v878 = vsub.s32 %v875, %v877
        %v879 = vrot.slane %v871, %v878
        %v881 = vunpack.c.l.s4 1966171168
        %v882 = vunpack.c.0.s8 %v881
        %v883 = vlaneseq
        %v884 = vshrl.u32 %v883, 7
        %v885 = vsub.s32 %v882, %v884
        %v886 = vrot.slane %v872, %v885
        %v887 = vcombine.low %v879, %v886
        %v889 = vunpack.c.l.s4 1966171168
        %v890 = vunpack.c.0.s8 %v889
        %v891 = vlaneseq
        %v892 = vshrl.u32 %v891, 7
        %v893 = vsub.s32 %v890, %v892
        %v894 = vrot.slane %v887, %v893
        %v896 = vmul.f32 %v866, %v894
        %v897 = vadd.f32 %v851, %v896
        %898 = vrot.lane.b32.xlu0 %v515, 34
        %v899 = vpop.permute.xlu0 %898
        %900 = vrot.lane.b32.xlu0 %v516, 34
        %v901 = vpop.permute.xlu0 %900
        %902 = vrot.lane.b32.xlu0 %v523, 34
        %v903 = vpop.permute.xlu0 %902
        %904 = vrot.lane.b32.xlu0 %v530, 34
        %v905 = vpop.permute.xlu0 %904
        %vm906 = vcmp.lt.s32.totalorder %v333, 34
        %v907 = vsel %vm906, %v903, %v905
        %v908 = vsel %vm906, %v901, %v903
        %v909 = vsel %vm906, %v899, %v901
        %v910 = vsel %vm906, %v905, %v899
        %s911 = scalar_lea.vmem [#allocation6], 32
        %v912 = vld [vmem:[%s911] ss:$8 sm:$0xf]
        %v917 = vcombine.low %v910, %v909
        %v918 = vcombine.low %v908, %v907
        %v920 = vunpack.c.l.s4 1966171168
        %v921 = vunpack.c.0.s8 %v920
        %v922 = vlaneseq
        %v923 = vshrl.u32 %v922, 7
        %v924 = vsub.s32 %v921, %v923
        %v925 = vrot.slane %v917, %v924
        %v927 = vunpack.c.l.s4 1966171168
        %v928 = vunpack.c.0.s8 %v927
        %v929 = vlaneseq
        %v930 = vshrl.u32 %v929, 7
        %v931 = vsub.s32 %v928, %v930
        %v932 = vrot.slane %v918, %v931
        %v933 = vcombine.low %v925, %v932
        %v935 = vunpack.c.l.s4 1966171168
        %v936 = vunpack.c.0.s8 %v935
        %v937 = vlaneseq
        %v938 = vshrl.u32 %v937, 7
        %v939 = vsub.s32 %v936, %v938
        %v940 = vrot.slane %v933, %v939
        %v942 = vmul.f32 %v912, %v940
        %v943 = vadd.f32 %v897, %v942
        %944 = vrot.lane.b32.xlu0 %v515, 33
        %v945 = vpop.permute.xlu0 %944
        %946 = vrot.lane.b32.xlu0 %v516, 33
        %v947 = vpop.permute.xlu0 %946
        %948 = vrot.lane.b32.xlu0 %v523, 33
        %v949 = vpop.permute.xlu0 %948
        %950 = vrot.lane.b32.xlu0 %v530, 33
        %v951 = vpop.permute.xlu0 %950
        %vm952 = vcmp.lt.s32.totalorder %v333, 33
        %v953 = vsel %vm952, %v949, %v951
        %v954 = vsel %vm952, %v947, %v949
        %v955 = vsel %vm952, %v945, %v947
        %v956 = vsel %vm952, %v951, %v945
        %s957 = scalar_lea.vmem [#allocation6], 33
        %v958 = vld [vmem:[%s957] ss:$8 sm:$0xf]
        %v963 = vcombine.low %v956, %v955
        %v964 = vcombine.low %v954, %v953
        %v966 = vunpack.c.l.s4 1966171168
        %v967 = vunpack.c.0.s8 %v966
        %v968 = vlaneseq
        %v969 = vshrl.u32 %v968, 7
        %v970 = vsub.s32 %v967, %v969
        %v971 = vrot.slane %v963, %v970
        %v973 = vunpack.c.l.s4 1966171168
        %v974 = vunpack.c.0.s8 %v973
        %v975 = vlaneseq
        %v976 = vshrl.u32 %v975, 7
        %v977 = vsub.s32 %v974, %v976
        %v978 = vrot.slane %v964, %v977
        %v979 = vcombine.low %v971, %v978
        %v981 = vunpack.c.l.s4 1966171168
        %v982 = vunpack.c.0.s8 %v981
        %v983 = vlaneseq
        %v984 = vshrl.u32 %v983, 7
        %v985 = vsub.s32 %v982, %v984
        %v986 = vrot.slane %v979, %v985
        %v988 = vmul.f32 %v958, %v986
        %v989 = vadd.f32 %v943, %v988
        %990 = vrot.lane.b32.xlu0 %v515, 32
        %v991 = vpop.permute.xlu0 %990
        %992 = vrot.lane.b32.xlu0 %v516, 32
        %v993 = vpop.permute.xlu0 %992
        %994 = vrot.lane.b32.xlu0 %v523, 32
        %v995 = vpop.permute.xlu0 %994
        %996 = vrot.lane.b32.xlu0 %v530, 32
        %v997 = vpop.permute.xlu0 %996
        %vm998 = vcmp.lt.s32.totalorder %v333, 32
        %v999 = vsel %vm998, %v995, %v997
        %v1000 = vsel %vm998, %v993, %v995
        %v1001 = vsel %vm998, %v991, %v993
        %v1002 = vsel %vm998, %v997, %v991
        %s1003 = scalar_lea.vmem [#allocation6], 34
        %v1004 = vld [vmem:[%s1003] ss:$8 sm:$0xf]
        %v1009 = vcombine.low %v1002, %v1001
        %v1010 = vcombine.low %v1000, %v999
        %v1012 = vunpack.c.l.s4 1966171168
        %v1013 = vunpack.c.0.s8 %v1012
        %v1014 = vlaneseq
        %v1015 = vshrl.u32 %v1014, 7
        %v1016 = vsub.s32 %v1013, %v1015
        %v1017 = vrot.slane %v1009, %v1016
        %v1019 = vunpack.c.l.s4 1966171168
        %v1020 = vunpack.c.0.s8 %v1019
        %v1021 = vlaneseq
        %v1022 = vshrl.u32 %v1021, 7
        %v1023 = vsub.s32 %v1020, %v1022
        %v1024 = vrot.slane %v1010, %v1023
        %v1025 = vcombine.low %v1017, %v1024
        %v1027 = vunpack.c.l.s4 1966171168
        %v1028 = vunpack.c.0.s8 %v1027
        %v1029 = vlaneseq
        %v1030 = vshrl.u32 %v1029, 7
        %v1031 = vsub.s32 %v1028, %v1030
        %v1032 = vrot.slane %v1025, %v1031
        %v1034 = vmul.f32 %v1004, %v1032
        %v1035 = vadd.f32 %v989, %v1034
        %1036 = vrot.lane.b32.xlu0 %v515, 31
        %v1037 = vpop.permute.xlu0 %1036
        %1038 = vrot.lane.b32.xlu0 %v516, 31
        %v1039 = vpop.permute.xlu0 %1038
        %1040 = vrot.lane.b32.xlu0 %v523, 31
        %v1041 = vpop.permute.xlu0 %1040
        %1042 = vrot.lane.b32.xlu0 %v530, 31
        %v1043 = vpop.permute.xlu0 %1042
        %vm1044 = vcmp.lt.s32.totalorder %v333, 31
        %v1045 = vsel %vm1044, %v1041, %v1043
        %v1046 = vsel %vm1044, %v1039, %v1041
        %v1047 = vsel %vm1044, %v1037, %v1039
        %v1048 = vsel %vm1044, %v1043, %v1037
        %s1049 = scalar_lea.vmem [#allocation6], 35
        %v1050 = vld [vmem:[%s1049] ss:$8 sm:$0xf]
        %v1055 = vcombine.low %v1048, %v1047
        %v1056 = vcombine.low %v1046, %v1045
        %v1058 = vunpack.c.l.s4 1966171168
        %v1059 = vunpack.c.0.s8 %v1058
        %v1060 = vlaneseq
        %v1061 = vshrl.u32 %v1060, 7
        %v1062 = vsub.s32 %v1059, %v1061
        %v1063 = vrot.slane %v1055, %v1062
        %v1065 = vunpack.c.l.s4 1966171168
        %v1066 = vunpack.c.0.s8 %v1065
        %v1067 = vlaneseq
        %v1068 = vshrl.u32 %v1067, 7
        %v1069 = vsub.s32 %v1066, %v1068
        %v1070 = vrot.slane %v1056, %v1069
        %v1071 = vcombine.low %v1063, %v1070
        %v1073 = vunpack.c.l.s4 1966171168
        %v1074 = vunpack.c.0.s8 %v1073
        %v1075 = vlaneseq
        %v1076 = vshrl.u32 %v1075, 7
        %v1077 = vsub.s32 %v1074, %v1076
        %v1078 = vrot.slane %v1071, %v1077
        %v1080 = vmul.f32 %v1050, %v1078
        %v1081 = vadd.f32 %v1035, %v1080
        %1082 = vrot.lane.b32.xlu0 %v515, 30
        %v1083 = vpop.permute.xlu0 %1082
        %1084 = vrot.lane.b32.xlu0 %v516, 30
        %v1085 = vpop.permute.xlu0 %1084
        %1086 = vrot.lane.b32.xlu0 %v523, 30
        %v1087 = vpop.permute.xlu0 %1086
        %1088 = vrot.lane.b32.xlu0 %v530, 30
        %v1089 = vpop.permute.xlu0 %1088
        %vm1090 = vcmp.lt.s32.totalorder %v333, 30
        %v1091 = vsel %vm1090, %v1087, %v1089
        %v1092 = vsel %vm1090, %v1085, %v1087
        %v1093 = vsel %vm1090, %v1083, %v1085
        %v1094 = vsel %vm1090, %v1089, %v1083
        %s1095 = scalar_lea.vmem [#allocation6], 36
        %v1096 = vld [vmem:[%s1095] ss:$8 sm:$0xf]
        %v1101 = vcombine.low %v1094, %v1093
        %v1102 = vcombine.low %v1092, %v1091
        %v1104 = vunpack.c.l.s4 1966171168
        %v1105 = vunpack.c.0.s8 %v1104
        %v1106 = vlaneseq
        %v1107 = vshrl.u32 %v1106, 7
        %v1108 = vsub.s32 %v1105, %v1107
        %v1109 = vrot.slane %v1101, %v1108
        %v1111 = vunpack.c.l.s4 1966171168
        %v1112 = vunpack.c.0.s8 %v1111
        %v1113 = vlaneseq
        %v1114 = vshrl.u32 %v1113, 7
        %v1115 = vsub.s32 %v1112, %v1114
        %v1116 = vrot.slane %v1102, %v1115
        %v1117 = vcombine.low %v1109, %v1116
        %v1119 = vunpack.c.l.s4 1966171168
        %v1120 = vunpack.c.0.s8 %v1119
        %v1121 = vlaneseq
        %v1122 = vshrl.u32 %v1121, 7
        %v1123 = vsub.s32 %v1120, %v1122
        %v1124 = vrot.slane %v1117, %v1123
        %v1126 = vmul.f32 %v1096, %v1124
        %v1127 = vadd.f32 %v1081, %v1126
        %1128 = vrot.lane.b32.xlu0 %v515, 29
        %v1129 = vpop.permute.xlu0 %1128
        %1130 = vrot.lane.b32.xlu0 %v516, 29
        %v1131 = vpop.permute.xlu0 %1130
        %1132 = vrot.lane.b32.xlu0 %v523, 29
        %v1133 = vpop.permute.xlu0 %1132
        %1134 = vrot.lane.b32.xlu0 %v530, 29
        %v1135 = vpop.permute.xlu0 %1134
        %vm1136 = vcmp.lt.s32.totalorder %v333, 29
        %v1137 = vsel %vm1136, %v1133, %v1135
        %v1138 = vsel %vm1136, %v1131, %v1133
        %v1139 = vsel %vm1136, %v1129, %v1131
        %v1140 = vsel %vm1136, %v1135, %v1129
        %s1141 = scalar_lea.vmem [#allocation6], 37
        %v1142 = vld [vmem:[%s1141] ss:$8 sm:$0xf]
        %v1147 = vcombine.low %v1140, %v1139
        %v1148 = vcombine.low %v1138, %v1137
        %v1150 = vunpack.c.l.s4 1966171168
        %v1151 = vunpack.c.0.s8 %v1150
        %v1152 = vlaneseq
        %v1153 = vshrl.u32 %v1152, 7
        %v1154 = vsub.s32 %v1151, %v1153
        %v1155 = vrot.slane %v1147, %v1154
        %v1157 = vunpack.c.l.s4 1966171168
        %v1158 = vunpack.c.0.s8 %v1157
        %v1159 = vlaneseq
        %v1160 = vshrl.u32 %v1159, 7
        %v1161 = vsub.s32 %v1158, %v1160
        %v1162 = vrot.slane %v1148, %v1161
        %v1163 = vcombine.low %v1155, %v1162
        %v1165 = vunpack.c.l.s4 1966171168
        %v1166 = vunpack.c.0.s8 %v1165
        %v1167 = vlaneseq
        %v1168 = vshrl.u32 %v1167, 7
        %v1169 = vsub.s32 %v1166, %v1168
        %v1170 = vrot.slane %v1163, %v1169
        %v1172 = vmul.f32 %v1142, %v1170
        %v1173 = vadd.f32 %v1127, %v1172
        %1174 = vrot.lane.b32.xlu0 %v515, 19
        %v1175 = vpop.permute.xlu0 %1174
        %1176 = vrot.lane.b32.xlu0 %v516, 19
        %v1177 = vpop.permute.xlu0 %1176
        %1178 = vrot.lane.b32.xlu0 %v523, 19
        %v1179 = vpop.permute.xlu0 %1178
        %1180 = vrot.lane.b32.xlu0 %v530, 19
        %v1181 = vpop.permute.xlu0 %1180
        %vm1182 = vcmp.lt.s32.totalorder %v333, 19
        %v1183 = vsel %vm1182, %v1179, %v1181
        %v1184 = vsel %vm1182, %v1177, %v1179
        %v1185 = vsel %vm1182, %v1175, %v1177
        %v1186 = vsel %vm1182, %v1181, %v1175
        %s1187 = scalar_lea.vmem [#allocation6], 38
        %v1188 = vld [vmem:[%s1187] ss:$8 sm:$0xf]
        %v1193 = vcombine.low %v1186, %v1185
        %v1194 = vcombine.low %v1184, %v1183
        %v1196 = vunpack.c.l.s4 1966171168
        %v1197 = vunpack.c.0.s8 %v1196
        %v1198 = vlaneseq
        %v1199 = vshrl.u32 %v1198, 7
        %v1200 = vsub.s32 %v1197, %v1199
        %v1201 = vrot.slane %v1193, %v1200
        %v1203 = vunpack.c.l.s4 1966171168
        %v1204 = vunpack.c.0.s8 %v1203
        %v1205 = vlaneseq
        %v1206 = vshrl.u32 %v1205, 7
        %v1207 = vsub.s32 %v1204, %v1206
        %v1208 = vrot.slane %v1194, %v1207
        %v1209 = vcombine.low %v1201, %v1208
        %v1211 = vunpack.c.l.s4 1966171168
        %v1212 = vunpack.c.0.s8 %v1211
        %v1213 = vlaneseq
        %v1214 = vshrl.u32 %v1213, 7
        %v1215 = vsub.s32 %v1212, %v1214
        %v1216 = vrot.slane %v1209, %v1215
        %v1218 = vmul.f32 %v1188, %v1216
        %v1219 = vadd.f32 %v1173, %v1218
        %1220 = vrot.lane.b32.xlu0 %v515, 18
        %v1221 = vpop.permute.xlu0 %1220
        %1222 = vrot.lane.b32.xlu0 %v516, 18
        %v1223 = vpop.permute.xlu0 %1222
        %1224 = vrot.lane.b32.xlu0 %v523, 18
        %v1225 = vpop.permute.xlu0 %1224
        %1226 = vrot.lane.b32.xlu0 %v530, 18
        %v1227 = vpop.permute.xlu0 %1226
        %vm1228 = vcmp.lt.s32.totalorder %v333, 18
        %v1229 = vsel %vm1228, %v1225, %v1227
        %v1230 = vsel %vm1228, %v1223, %v1225
        %v1231 = vsel %vm1228, %v1221, %v1223
        %v1232 = vsel %vm1228, %v1227, %v1221
        %s1233 = scalar_lea.vmem [#allocation6], 39
        %v1234 = vld [vmem:[%s1233] ss:$8 sm:$0xf]
        %v1239 = vcombine.low %v1232, %v1231
        %v1240 = vcombine.low %v1230, %v1229
        %v1242 = vunpack.c.l.s4 1966171168
        %v1243 = vunpack.c.0.s8 %v1242
        %v1244 = vlaneseq
        %v1245 = vshrl.u32 %v1244, 7
        %v1246 = vsub.s32 %v1243, %v1245
        %v1247 = vrot.slane %v1239, %v1246
        %v1249 = vunpack.c.l.s4 1966171168
        %v1250 = vunpack.c.0.s8 %v1249
        %v1251 = vlaneseq
        %v1252 = vshrl.u32 %v1251, 7
        %v1253 = vsub.s32 %v1250, %v1252
        %v1254 = vrot.slane %v1240, %v1253
        %v1255 = vcombine.low %v1247, %v1254
        %v1257 = vunpack.c.l.s4 1966171168
        %v1258 = vunpack.c.0.s8 %v1257
        %v1259 = vlaneseq
        %v1260 = vshrl.u32 %v1259, 7
        %v1261 = vsub.s32 %v1258, %v1260
        %v1262 = vrot.slane %v1255, %v1261
        %v1264 = vmul.f32 %v1234, %v1262
        %v1265 = vadd.f32 %v1219, %v1264
        %1266 = vrot.lane.b32.xlu0 %v515, 17
        %v1267 = vpop.permute.xlu0 %1266
        %1268 = vrot.lane.b32.xlu0 %v516, 17
        %v1269 = vpop.permute.xlu0 %1268
        %1270 = vrot.lane.b32.xlu0 %v523, 17
        %v1271 = vpop.permute.xlu0 %1270
        %1272 = vrot.lane.b32.xlu0 %v530, 17
        %v1273 = vpop.permute.xlu0 %1272
        %vm1274 = vcmp.lt.s32.totalorder %v333, 17
        %v1275 = vsel %vm1274, %v1271, %v1273
        %v1276 = vsel %vm1274, %v1269, %v1271
        %v1277 = vsel %vm1274, %v1267, %v1269
        %v1278 = vsel %vm1274, %v1273, %v1267
        %s1279 = scalar_lea.vmem [#allocation6], 64
        %v1280 = vld [vmem:[%s1279] ss:$8 sm:$0xf]
        %v1285 = vcombine.low %v1278, %v1277
        %v1286 = vcombine.low %v1276, %v1275
        %v1288 = vunpack.c.l.s4 1966171168
        %v1289 = vunpack.c.0.s8 %v1288
        %v1290 = vlaneseq
        %v1291 = vshrl.u32 %v1290, 7
        %v1292 = vsub.s32 %v1289, %v1291
        %v1293 = vrot.slane %v1285, %v1292
        %v1295 = vunpack.c.l.s4 1966171168
        %v1296 = vunpack.c.0.s8 %v1295
        %v1297 = vlaneseq
        %v1298 = vshrl.u32 %v1297, 7
        %v1299 = vsub.s32 %v1296, %v1298
        %v1300 = vrot.slane %v1286, %v1299
        %v1301 = vcombine.low %v1293, %v1300
        %v1303 = vunpack.c.l.s4 1966171168
        %v1304 = vunpack.c.0.s8 %v1303
        %v1305 = vlaneseq
        %v1306 = vshrl.u32 %v1305, 7
        %v1307 = vsub.s32 %v1304, %v1306
        %v1308 = vrot.slane %v1301, %v1307
        %v1310 = vmul.f32 %v1280, %v1308
        %v1311 = vadd.f32 %v1265, %v1310
        %1312 = vrot.lane.b32.xlu0 %v515, 16
        %v1313 = vpop.permute.xlu0 %1312
        %1314 = vrot.lane.b32.xlu0 %v516, 16
        %v1315 = vpop.permute.xlu0 %1314
        %1316 = vrot.lane.b32.xlu0 %v523, 16
        %v1317 = vpop.permute.xlu0 %1316
        %1318 = vrot.lane.b32.xlu0 %v530, 16
        %v1319 = vpop.permute.xlu0 %1318
        %vm1320 = vcmp.lt.s32.totalorder %v333, 16
        %v1321 = vsel %vm1320, %v1317, %v1319
        %v1322 = vsel %vm1320, %v1315, %v1317
        %v1323 = vsel %vm1320, %v1313, %v1315
        %v1324 = vsel %vm1320, %v1319, %v1313
        %s1325 = scalar_lea.vmem [#allocation6], 65
        %v1326 = vld [vmem:[%s1325] ss:$8 sm:$0xf]
        %v1331 = vcombine.low %v1324, %v1323
        %v1332 = vcombine.low %v1322, %v1321
        %v1334 = vunpack.c.l.s4 1966171168
        %v1335 = vunpack.c.0.s8 %v1334
        %v1336 = vlaneseq
        %v1337 = vshrl.u32 %v1336, 7
        %v1338 = vsub.s32 %v1335, %v1337
        %v1339 = vrot.slane %v1331, %v1338
        %v1341 = vunpack.c.l.s4 1966171168
        %v1342 = vunpack.c.0.s8 %v1341
        %v1343 = vlaneseq
        %v1344 = vshrl.u32 %v1343, 7
        %v1345 = vsub.s32 %v1342, %v1344
        %v1346 = vrot.slane %v1332, %v1345
        %v1347 = vcombine.low %v1339, %v1346
        %v1349 = vunpack.c.l.s4 1966171168
        %v1350 = vunpack.c.0.s8 %v1349
        %v1351 = vlaneseq
        %v1352 = vshrl.u32 %v1351, 7
        %v1353 = vsub.s32 %v1350, %v1352
        %v1354 = vrot.slane %v1347, %v1353
        %v1356 = vmul.f32 %v1326, %v1354
        %v1357 = vadd.f32 %v1311, %v1356
        %1358 = vrot.lane.b32.xlu0 %v515, 15
        %v1359 = vpop.permute.xlu0 %1358
        %1360 = vrot.lane.b32.xlu0 %v516, 15
        %v1361 = vpop.permute.xlu0 %1360
        %1362 = vrot.lane.b32.xlu0 %v523, 15
        %v1363 = vpop.permute.xlu0 %1362
        %1364 = vrot.lane.b32.xlu0 %v530, 15
        %v1365 = vpop.permute.xlu0 %1364
        %vm1366 = vcmp.lt.s32.totalorder %v333, 15
        %v1367 = vsel %vm1366, %v1363, %v1365
        %v1368 = vsel %vm1366, %v1361, %v1363
        %v1369 = vsel %vm1366, %v1359, %v1361
        %v1370 = vsel %vm1366, %v1365, %v1359
        %s1371 = scalar_lea.vmem [#allocation6], 66
        %v1372 = vld [vmem:[%s1371] ss:$8 sm:$0xf]
        %v1377 = vcombine.low %v1370, %v1369
        %v1378 = vcombine.low %v1368, %v1367
        %v1380 = vunpack.c.l.s4 1966171168
        %v1381 = vunpack.c.0.s8 %v1380
        %v1382 = vlaneseq
        %v1383 = vshrl.u32 %v1382, 7
        %v1384 = vsub.s32 %v1381, %v1383
        %v1385 = vrot.slane %v1377, %v1384
        %v1387 = vunpack.c.l.s4 1966171168
        %v1388 = vunpack.c.0.s8 %v1387
        %v1389 = vlaneseq
        %v1390 = vshrl.u32 %v1389, 7
        %v1391 = vsub.s32 %v1388, %v1390
        %v1392 = vrot.slane %v1378, %v1391
        %v1393 = vcombine.low %v1385, %v1392
        %v1395 = vunpack.c.l.s4 1966171168
        %v1396 = vunpack.c.0.s8 %v1395
        %v1397 = vlaneseq
        %v1398 = vshrl.u32 %v1397, 7
        %v1399 = vsub.s32 %v1396, %v1398
        %v1400 = vrot.slane %v1393, %v1399
        %v1402 = vmul.f32 %v1372, %v1400
        %v1403 = vadd.f32 %v1357, %v1402
        %1404 = vrot.lane.b32.xlu0 %v515, 14
        %v1405 = vpop.permute.xlu0 %1404
        %1406 = vrot.lane.b32.xlu0 %v516, 14
        %v1407 = vpop.permute.xlu0 %1406
        %1408 = vrot.lane.b32.xlu0 %v523, 14
        %v1409 = vpop.permute.xlu0 %1408
        %1410 = vrot.lane.b32.xlu0 %v530, 14
        %v1411 = vpop.permute.xlu0 %1410
        %vm1412 = vcmp.lt.s32.totalorder %v333, 14
        %v1413 = vsel %vm1412, %v1409, %v1411
        %v1414 = vsel %vm1412, %v1407, %v1409
        %v1415 = vsel %vm1412, %v1405, %v1407
        %v1416 = vsel %vm1412, %v1411, %v1405
        %s1417 = scalar_lea.vmem [#allocation6], 67
        %v1418 = vld [vmem:[%s1417] ss:$8 sm:$0xf]
        %v1423 = vcombine.low %v1416, %v1415
        %v1424 = vcombine.low %v1414, %v1413
        %v1426 = vunpack.c.l.s4 1966171168
        %v1427 = vunpack.c.0.s8 %v1426
        %v1428 = vlaneseq
        %v1429 = vshrl.u32 %v1428, 7
        %v1430 = vsub.s32 %v1427, %v1429
        %v1431 = vrot.slane %v1423, %v1430
        %v1433 = vunpack.c.l.s4 1966171168
        %v1434 = vunpack.c.0.s8 %v1433
        %v1435 = vlaneseq
        %v1436 = vshrl.u32 %v1435, 7
        %v1437 = vsub.s32 %v1434, %v1436
        %v1438 = vrot.slane %v1424, %v1437
        %v1439 = vcombine.low %v1431, %v1438
        %v1441 = vunpack.c.l.s4 1966171168
        %v1442 = vunpack.c.0.s8 %v1441
        %v1443 = vlaneseq
        %v1444 = vshrl.u32 %v1443, 7
        %v1445 = vsub.s32 %v1442, %v1444
        %v1446 = vrot.slane %v1439, %v1445
        %v1448 = vmul.f32 %v1418, %v1446
        %v1449 = vadd.f32 %v1403, %v1448
        %1450 = vrot.lane.b32.xlu0 %v515, 13
        %v1451 = vpop.permute.xlu0 %1450
        %1452 = vrot.lane.b32.xlu0 %v516, 13
        %v1453 = vpop.permute.xlu0 %1452
        %1454 = vrot.lane.b32.xlu0 %v523, 13
        %v1455 = vpop.permute.xlu0 %1454
        %1456 = vrot.lane.b32.xlu0 %v530, 13
        %v1457 = vpop.permute.xlu0 %1456
        %vm1458 = vcmp.lt.s32.totalorder %v333, 13
        %v1459 = vsel %vm1458, %v1455, %v1457
        %v1460 = vsel %vm1458, %v1453, %v1455
        %v1461 = vsel %vm1458, %v1451, %v1453
        %v1462 = vsel %vm1458, %v1457, %v1451
        %s1463 = scalar_lea.vmem [#allocation6], 68
        %v1464 = vld [vmem:[%s1463] ss:$8 sm:$0xf]
        %v1469 = vcombine.low %v1462, %v1461
        %v1470 = vcombine.low %v1460, %v1459
        %v1472 = vunpack.c.l.s4 1966171168
        %v1473 = vunpack.c.0.s8 %v1472
        %v1474 = vlaneseq
        %v1475 = vshrl.u32 %v1474, 7
        %v1476 = vsub.s32 %v1473, %v1475
        %v1477 = vrot.slane %v1469, %v1476
        %v1479 = vunpack.c.l.s4 1966171168
        %v1480 = vunpack.c.0.s8 %v1479
        %v1481 = vlaneseq
        %v1482 = vshrl.u32 %v1481, 7
        %v1483 = vsub.s32 %v1480, %v1482
        %v1484 = vrot.slane %v1470, %v1483
        %v1485 = vcombine.low %v1477, %v1484
        %v1487 = vunpack.c.l.s4 1966171168
        %v1488 = vunpack.c.0.s8 %v1487
        %v1489 = vlaneseq
        %v1490 = vshrl.u32 %v1489, 7
        %v1491 = vsub.s32 %v1488, %v1490
        %v1492 = vrot.slane %v1485, %v1491
        %v1494 = vmul.f32 %v1464, %v1492
        %v1495 = vadd.f32 %v1449, %v1494
        %1496 = vrot.lane.b32.xlu0 %v515, 3
        %v1497 = vpop.permute.xlu0 %1496
        %1498 = vrot.lane.b32.xlu0 %v516, 3
        %v1499 = vpop.permute.xlu0 %1498
        %1500 = vrot.lane.b32.xlu0 %v523, 3
        %v1501 = vpop.permute.xlu0 %1500
        %1502 = vrot.lane.b32.xlu0 %v530, 3
        %v1503 = vpop.permute.xlu0 %1502
        %vm1504 = vcmp.lt.s32.totalorder %v333, 3
        %v1505 = vsel %vm1504, %v1501, %v1503
        %v1506 = vsel %vm1504, %v1499, %v1501
        %v1507 = vsel %vm1504, %v1497, %v1499
        %v1508 = vsel %vm1504, %v1503, %v1497
        %s1509 = scalar_lea.vmem [#allocation6], 69
        %v1510 = vld [vmem:[%s1509] ss:$8 sm:$0xf]
        %v1515 = vcombine.low %v1508, %v1507
        %v1516 = vcombine.low %v1506, %v1505
        %v1518 = vunpack.c.l.s4 1966171168
        %v1519 = vunpack.c.0.s8 %v1518
        %v1520 = vlaneseq
        %v1521 = vshrl.u32 %v1520, 7
        %v1522 = vsub.s32 %v1519, %v1521
        %v1523 = vrot.slane %v1515, %v1522
        %v1525 = vunpack.c.l.s4 1966171168
        %v1526 = vunpack.c.0.s8 %v1525
        %v1527 = vlaneseq
        %v1528 = vshrl.u32 %v1527, 7
        %v1529 = vsub.s32 %v1526, %v1528
        %v1530 = vrot.slane %v1516, %v1529
        %v1531 = vcombine.low %v1523, %v1530
        %v1533 = vunpack.c.l.s4 1966171168
        %v1534 = vunpack.c.0.s8 %v1533
        %v1535 = vlaneseq
        %v1536 = vshrl.u32 %v1535, 7
        %v1537 = vsub.s32 %v1534, %v1536
        %v1538 = vrot.slane %v1531, %v1537
        %v1540 = vmul.f32 %v1510, %v1538
        %v1541 = vadd.f32 %v1495, %v1540
        %1542 = vrot.lane.b32.xlu0 %v515, 2
        %v1543 = vpop.permute.xlu0 %1542
        %1544 = vrot.lane.b32.xlu0 %v516, 2
        %v1545 = vpop.permute.xlu0 %1544
        %1546 = vrot.lane.b32.xlu0 %v523, 2
        %v1547 = vpop.permute.xlu0 %1546
        %1548 = vrot.lane.b32.xlu0 %v530, 2
        %v1549 = vpop.permute.xlu0 %1548
        %vm1550 = vcmp.lt.s32.totalorder %v333, 2
        %v1551 = vsel %vm1550, %v1547, %v1549
        %v1552 = vsel %vm1550, %v1545, %v1547
        %v1553 = vsel %vm1550, %v1543, %v1545
        %v1554 = vsel %vm1550, %v1549, %v1543
        %s1555 = scalar_lea.vmem [#allocation6], 70
        %v1556 = vld [vmem:[%s1555] ss:$8 sm:$0xf]
        %v1561 = vcombine.low %v1554, %v1553
        %v1562 = vcombine.low %v1552, %v1551
        %v1564 = vunpack.c.l.s4 1966171168
        %v1565 = vunpack.c.0.s8 %v1564
        %v1566 = vlaneseq
        %v1567 = vshrl.u32 %v1566, 7
        %v1568 = vsub.s32 %v1565, %v1567
        %v1569 = vrot.slane %v1561, %v1568
        %v1571 = vunpack.c.l.s4 1966171168
        %v1572 = vunpack.c.0.s8 %v1571
        %v1573 = vlaneseq
        %v1574 = vshrl.u32 %v1573, 7
        %v1575 = vsub.s32 %v1572, %v1574
        %v1576 = vrot.slane %v1562, %v1575
        %v1577 = vcombine.low %v1569, %v1576
        %v1579 = vunpack.c.l.s4 1966171168
        %v1580 = vunpack.c.0.s8 %v1579
        %v1581 = vlaneseq
        %v1582 = vshrl.u32 %v1581, 7
        %v1583 = vsub.s32 %v1580, %v1582
        %v1584 = vrot.slane %v1577, %v1583
        %v1586 = vmul.f32 %v1556, %v1584
        %v1587 = vadd.f32 %v1541, %v1586
        %1588 = vrot.lane.b32.xlu0 %v515, 1
        %v1589 = vpop.permute.xlu0 %1588
        %1590 = vrot.lane.b32.xlu0 %v516, 1
        %v1591 = vpop.permute.xlu0 %1590
        %1592 = vrot.lane.b32.xlu0 %v523, 1
        %v1593 = vpop.permute.xlu0 %1592
        %1594 = vrot.lane.b32.xlu0 %v530, 1
        %v1595 = vpop.permute.xlu0 %1594
        %vm1596 = vcmp.lt.s32.totalorder %v333, 1
        %v1597 = vsel %vm1596, %v1593, %v1595
        %v1598 = vsel %vm1596, %v1591, %v1593
        %v1599 = vsel %vm1596, %v1589, %v1591
        %v1600 = vsel %vm1596, %v1595, %v1589
        %s1601 = scalar_lea.vmem [#allocation6], 71
        %v1602 = vld [vmem:[%s1601] ss:$8 sm:$0xf]
        %v1607 = vcombine.low %v1600, %v1599
        %v1608 = vcombine.low %v1598, %v1597
        %v1610 = vunpack.c.l.s4 1966171168
        %v1611 = vunpack.c.0.s8 %v1610
        %v1612 = vlaneseq
        %v1613 = vshrl.u32 %v1612, 7
        %v1614 = vsub.s32 %v1611, %v1613
        %v1615 = vrot.slane %v1607, %v1614
        %v1617 = vunpack.c.l.s4 1966171168
        %v1618 = vunpack.c.0.s8 %v1617
        %v1619 = vlaneseq
        %v1620 = vshrl.u32 %v1619, 7
        %v1621 = vsub.s32 %v1618, %v1620
        %v1622 = vrot.slane %v1608, %v1621
        %v1623 = vcombine.low %v1615, %v1622
        %v1625 = vunpack.c.l.s4 1966171168
        %v1626 = vunpack.c.0.s8 %v1625
        %v1627 = vlaneseq
        %v1628 = vshrl.u32 %v1627, 7
        %v1629 = vsub.s32 %v1626, %v1628
        %v1630 = vrot.slane %v1623, %v1629
        %v1632 = vmul.f32 %v1602, %v1630
        %v1633 = vadd.f32 %v1587, %v1632
        %s1634 = scalar_lea.vmem [#allocation6], 96
        %v1635 = vld [vmem:[%s1634] ss:$8 sm:$0xf]
        %v1640 = vcombine.low %v515, %v516
        %v1641 = vcombine.low %v523, %v530
        %v1643 = vunpack.c.l.s4 1966171168
        %v1644 = vunpack.c.0.s8 %v1643
        %v1645 = vlaneseq
        %v1646 = vshrl.u32 %v1645, 7
        %v1647 = vsub.s32 %v1644, %v1646
        %v1648 = vrot.slane %v1640, %v1647
        %v1650 = vunpack.c.l.s4 1966171168
        %v1651 = vunpack.c.0.s8 %v1650
        %v1652 = vlaneseq
        %v1653 = vshrl.u32 %v1652, 7
        %v1654 = vsub.s32 %v1651, %v1653
        %v1655 = vrot.slane %v1641, %v1654
        %v1656 = vcombine.low %v1648, %v1655
        %v1658 = vunpack.c.l.s4 1966171168
        %v1659 = vunpack.c.0.s8 %v1658
        %v1660 = vlaneseq
        %v1661 = vshrl.u32 %v1660, 7
        %v1662 = vsub.s32 %v1659, %v1661
        %v1663 = vrot.slane %v1656, %v1662
        %v1665 = vmul.f32 %v1635, %v1663
        %v1666 = vadd.f32 %v1633, %v1665
        %1667 = vrot.lane.b32.xlu0 %v515, 127
        %v1668 = vpop.permute.xlu0 %1667
        %1669 = vrot.lane.b32.xlu0 %v516, 127
        %v1670 = vpop.permute.xlu0 %1669
        %1671 = vrot.lane.b32.xlu0 %v523, 127
        %v1672 = vpop.permute.xlu0 %1671
        %1673 = vrot.lane.b32.xlu0 %v530, 127
        %v1674 = vpop.permute.xlu0 %1673
        %vm1675 = vcmp.lt.s32.totalorder %v333, 127
        %v1676 = vsel %vm1675, %v1672, %v1674
        %v1677 = vsel %vm1675, %v1670, %v1672
        %v1678 = vsel %vm1675, %v1668, %v1670
        %v1679 = vsel %vm1675, %v1674, %v1668
        %s1680 = scalar_lea.vmem [#allocation6], 97
        %v1681 = vld [vmem:[%s1680] ss:$8 sm:$0xf]
        %v1686 = vcombine.low %v1678, %v1677
        %v1687 = vcombine.low %v1676, %v1679
        %v1689 = vunpack.c.l.s4 1966171168
        %v1690 = vunpack.c.0.s8 %v1689
        %v1691 = vlaneseq
        %v1692 = vshrl.u32 %v1691, 7
        %v1693 = vsub.s32 %v1690, %v1692
        %v1694 = vrot.slane %v1686, %v1693
        %v1696 = vunpack.c.l.s4 1966171168
        %v1697 = vunpack.c.0.s8 %v1696
        %v1698 = vlaneseq
        %v1699 = vshrl.u32 %v1698, 7
        %v1700 = vsub.s32 %v1697, %v1699
        %v1701 = vrot.slane %v1687, %v1700
        %v1702 = vcombine.low %v1694, %v1701
        %v1704 = vunpack.c.l.s4 1966171168
        %v1705 = vunpack.c.0.s8 %v1704
        %v1706 = vlaneseq
        %v1707 = vshrl.u32 %v1706, 7
        %v1708 = vsub.s32 %v1705, %v1707
        %v1709 = vrot.slane %v1702, %v1708
        %v1711 = vmul.f32 %v1681, %v1709
        %v1712 = vadd.f32 %v1666, %v1711
        %1713 = vrot.lane.b32.xlu0 %v515, 126
        %v1714 = vpop.permute.xlu0 %1713
        %1715 = vrot.lane.b32.xlu0 %v516, 126
        %v1716 = vpop.permute.xlu0 %1715
        %1717 = vrot.lane.b32.xlu0 %v523, 126
        %v1718 = vpop.permute.xlu0 %1717
        %1719 = vrot.lane.b32.xlu0 %v530, 126
        %v1720 = vpop.permute.xlu0 %1719
        %vm1721 = vcmp.lt.s32.totalorder %v333, 126
        %v1722 = vsel %vm1721, %v1718, %v1720
        %v1723 = vsel %vm1721, %v1716, %v1718
        %v1724 = vsel %vm1721, %v1714, %v1716
        %v1725 = vsel %vm1721, %v1720, %v1714
        %s1726 = scalar_lea.vmem [#allocation6], 98
        %v1727 = vld [vmem:[%s1726] ss:$8 sm:$0xf]
        %v1732 = vcombine.low %v1724, %v1723
        %v1733 = vcombine.low %v1722, %v1725
        %v1735 = vunpack.c.l.s4 1966171168
        %v1736 = vunpack.c.0.s8 %v1735
        %v1737 = vlaneseq
        %v1738 = vshrl.u32 %v1737, 7
        %v1739 = vsub.s32 %v1736, %v1738
        %v1740 = vrot.slane %v1732, %v1739
        %v1742 = vunpack.c.l.s4 1966171168
        %v1743 = vunpack.c.0.s8 %v1742
        %v1744 = vlaneseq
        %v1745 = vshrl.u32 %v1744, 7
        %v1746 = vsub.s32 %v1743, %v1745
        %v1747 = vrot.slane %v1733, %v1746
        %v1748 = vcombine.low %v1740, %v1747
        %v1750 = vunpack.c.l.s4 1966171168
        %v1751 = vunpack.c.0.s8 %v1750
        %v1752 = vlaneseq
        %v1753 = vshrl.u32 %v1752, 7
        %v1754 = vsub.s32 %v1751, %v1753
        %v1755 = vrot.slane %v1748, %v1754
        %v1757 = vmul.f32 %v1727, %v1755
        %v1758 = vadd.f32 %v1712, %v1757
        %1759 = vrot.lane.b32.xlu0 %v515, 125
        %v1760 = vpop.permute.xlu0 %1759
        %1761 = vrot.lane.b32.xlu0 %v516, 125
        %v1762 = vpop.permute.xlu0 %1761
        %1763 = vrot.lane.b32.xlu0 %v523, 125
        %v1764 = vpop.permute.xlu0 %1763
        %1765 = vrot.lane.b32.xlu0 %v530, 125
        %v1766 = vpop.permute.xlu0 %1765
        %vm1767 = vcmp.lt.s32.totalorder %v333, 125
        %v1768 = vsel %vm1767, %v1764, %v1766
        %v1769 = vsel %vm1767, %v1762, %v1764
        %v1770 = vsel %vm1767, %v1760, %v1762
        %v1771 = vsel %vm1767, %v1766, %v1760
        %s1772 = scalar_lea.vmem [#allocation6], 99
        %v1773 = vld [vmem:[%s1772] ss:$8 sm:$0xf]
        %v1778 = vcombine.low %v1770, %v1769
        %v1779 = vcombine.low %v1768, %v1771
        %v1781 = vunpack.c.l.s4 1966171168
        %v1782 = vunpack.c.0.s8 %v1781
        %v1783 = vlaneseq
        %v1784 = vshrl.u32 %v1783, 7
        %v1785 = vsub.s32 %v1782, %v1784
        %v1786 = vrot.slane %v1778, %v1785
        %v1788 = vunpack.c.l.s4 1966171168
        %v1789 = vunpack.c.0.s8 %v1788
        %v1790 = vlaneseq
        %v1791 = vshrl.u32 %v1790, 7
        %v1792 = vsub.s32 %v1789, %v1791
        %v1793 = vrot.slane %v1779, %v1792
        %v1794 = vcombine.low %v1786, %v1793
        %v1796 = vunpack.c.l.s4 1966171168
        %v1797 = vunpack.c.0.s8 %v1796
        %v1798 = vlaneseq
        %v1799 = vshrl.u32 %v1798, 7
        %v1800 = vsub.s32 %v1797, %v1799
        %v1801 = vrot.slane %v1794, %v1800
        %v1803 = vmul.f32 %v1773, %v1801
        %v1804 = vadd.f32 %v1758, %v1803
        %1805 = vrot.lane.b32.xlu0 %v515, 115
        %v1806 = vpop.permute.xlu0 %1805
        %1807 = vrot.lane.b32.xlu0 %v516, 115
        %v1808 = vpop.permute.xlu0 %1807
        %1809 = vrot.lane.b32.xlu0 %v523, 115
        %v1810 = vpop.permute.xlu0 %1809
        %1811 = vrot.lane.b32.xlu0 %v530, 115
        %v1812 = vpop.permute.xlu0 %1811
        %vm1813 = vcmp.lt.s32.totalorder %v333, 115
        %v1814 = vsel %vm1813, %v1810, %v1812
        %v1815 = vsel %vm1813, %v1808, %v1810
        %v1816 = vsel %vm1813, %v1806, %v1808
        %v1817 = vsel %vm1813, %v1812, %v1806
        %s1818 = scalar_lea.vmem [#allocation6], 100
        %v1819 = vld [vmem:[%s1818] ss:$8 sm:$0xf]
        %v1824 = vcombine.low %v1816, %v1815
        %v1825 = vcombine.low %v1814, %v1817
        %v1827 = vunpack.c.l.s4 1966171168
        %v1828 = vunpack.c.0.s8 %v1827
        %v1829 = vlaneseq
        %v1830 = vshrl.u32 %v1829, 7
        %v1831 = vsub.s32 %v1828, %v1830
        %v1832 = vrot.slane %v1824, %v1831
        %v1834 = vunpack.c.l.s4 1966171168
        %v1835 = vunpack.c.0.s8 %v1834
        %v1836 = vlaneseq
        %v1837 = vshrl.u32 %v1836, 7
        %v1838 = vsub.s32 %v1835, %v1837
        %v1839 = vrot.slane %v1825, %v1838
        %v1840 = vcombine.low %v1832, %v1839
        %v1842 = vunpack.c.l.s4 1966171168
        %v1843 = vunpack.c.0.s8 %v1842
        %v1844 = vlaneseq
        %v1845 = vshrl.u32 %v1844, 7
        %v1846 = vsub.s32 %v1843, %v1845
        %v1847 = vrot.slane %v1840, %v1846
        %v1849 = vmul.f32 %v1819, %v1847
        %v1850 = vadd.f32 %v1804, %v1849
        %1851 = vrot.lane.b32.xlu0 %v515, 114
        %v1852 = vpop.permute.xlu0 %1851
        %1853 = vrot.lane.b32.xlu0 %v516, 114
        %v1854 = vpop.permute.xlu0 %1853
        %1855 = vrot.lane.b32.xlu0 %v523, 114
        %v1856 = vpop.permute.xlu0 %1855
        %1857 = vrot.lane.b32.xlu0 %v530, 114
        %v1858 = vpop.permute.xlu0 %1857
        %vm1859 = vcmp.lt.s32.totalorder %v333, 114
        %v1860 = vsel %vm1859, %v1856, %v1858
        %v1861 = vsel %vm1859, %v1854, %v1856
        %v1862 = vsel %vm1859, %v1852, %v1854
        %v1863 = vsel %vm1859, %v1858, %v1852
        %s1864 = scalar_lea.vmem [#allocation6], 101
        %v1865 = vld [vmem:[%s1864] ss:$8 sm:$0xf]
        %v1870 = vcombine.low %v1862, %v1861
        %v1871 = vcombine.low %v1860, %v1863
        %v1873 = vunpack.c.l.s4 1966171168
        %v1874 = vunpack.c.0.s8 %v1873
        %v1875 = vlaneseq
        %v1876 = vshrl.u32 %v1875, 7
        %v1877 = vsub.s32 %v1874, %v1876
        %v1878 = vrot.slane %v1870, %v1877
        %v1880 = vunpack.c.l.s4 1966171168
        %v1881 = vunpack.c.0.s8 %v1880
        %v1882 = vlaneseq
        %v1883 = vshrl.u32 %v1882, 7
        %v1884 = vsub.s32 %v1881, %v1883
        %v1885 = vrot.slane %v1871, %v1884
        %v1886 = vcombine.low %v1878, %v1885
        %v1888 = vunpack.c.l.s4 1966171168
        %v1889 = vunpack.c.0.s8 %v1888
        %v1890 = vlaneseq
        %v1891 = vshrl.u32 %v1890, 7
        %v1892 = vsub.s32 %v1889, %v1891
        %v1893 = vrot.slane %v1886, %v1892
        %v1895 = vmul.f32 %v1865, %v1893
        %v1896 = vadd.f32 %v1850, %v1895
        %1897 = vrot.lane.b32.xlu0 %v515, 113
        %v1898 = vpop.permute.xlu0 %1897
        %1899 = vrot.lane.b32.xlu0 %v516, 113
        %v1900 = vpop.permute.xlu0 %1899
        %1901 = vrot.lane.b32.xlu0 %v523, 113
        %v1902 = vpop.permute.xlu0 %1901
        %1903 = vrot.lane.b32.xlu0 %v530, 113
        %v1904 = vpop.permute.xlu0 %1903
        %vm1905 = vcmp.lt.s32.totalorder %v333, 113
        %v1906 = vsel %vm1905, %v1902, %v1904
        %v1907 = vsel %vm1905, %v1900, %v1902
        %v1908 = vsel %vm1905, %v1898, %v1900
        %v1909 = vsel %vm1905, %v1904, %v1898
        %s1910 = scalar_lea.vmem [#allocation6], 102
        %v1911 = vld [vmem:[%s1910] ss:$8 sm:$0xf]
        %v1916 = vcombine.low %v1908, %v1907
        %v1917 = vcombine.low %v1906, %v1909
        %v1919 = vunpack.c.l.s4 1966171168
        %v1920 = vunpack.c.0.s8 %v1919
        %v1921 = vlaneseq
        %v1922 = vshrl.u32 %v1921, 7
        %v1923 = vsub.s32 %v1920, %v1922
        %v1924 = vrot.slane %v1916, %v1923
        %v1926 = vunpack.c.l.s4 1966171168
        %v1927 = vunpack.c.0.s8 %v1926
        %v1928 = vlaneseq
        %v1929 = vshrl.u32 %v1928, 7
        %v1930 = vsub.s32 %v1927, %v1929
        %v1931 = vrot.slane %v1917, %v1930
        %v1932 = vcombine.low %v1924, %v1931
        %v1934 = vunpack.c.l.s4 1966171168
        %v1935 = vunpack.c.0.s8 %v1934
        %v1936 = vlaneseq
        %v1937 = vshrl.u32 %v1936, 7
        %v1938 = vsub.s32 %v1935, %v1937
        %v1939 = vrot.slane %v1932, %v1938
        %v1941 = vmul.f32 %v1911, %v1939
        %v1942 = vadd.f32 %v1896, %v1941
        %1943 = vrot.lane.b32.xlu0 %v515, 112
        %v1944 = vpop.permute.xlu0 %1943
        %1945 = vrot.lane.b32.xlu0 %v516, 112
        %v1946 = vpop.permute.xlu0 %1945
        %1947 = vrot.lane.b32.xlu0 %v523, 112
        %v1948 = vpop.permute.xlu0 %1947
        %1949 = vrot.lane.b32.xlu0 %v530, 112
        %v1950 = vpop.permute.xlu0 %1949
        %vm1951 = vcmp.lt.s32.totalorder %v333, 112
        %v1952 = vsel %vm1951, %v1948, %v1950
        %v1953 = vsel %vm1951, %v1946, %v1948
        %v1954 = vsel %vm1951, %v1944, %v1946
        %v1955 = vsel %vm1951, %v1950, %v1944
        %s1956 = scalar_lea.vmem [#allocation6], 103
        %v1957 = vld [vmem:[%s1956] ss:$8 sm:$0xf]
        %v1962 = vcombine.low %v1954, %v1953
        %v1963 = vcombine.low %v1952, %v1955
        %v1965 = vunpack.c.l.s4 1966171168
        %v1966 = vunpack.c.0.s8 %v1965
        %v1967 = vlaneseq
        %v1968 = vshrl.u32 %v1967, 7
        %v1969 = vsub.s32 %v1966, %v1968
        %v1970 = vrot.slane %v1962, %v1969
        %v1972 = vunpack.c.l.s4 1966171168
        %v1973 = vunpack.c.0.s8 %v1972
        %v1974 = vlaneseq
        %v1975 = vshrl.u32 %v1974, 7
        %v1976 = vsub.s32 %v1973, %v1975
        %v1977 = vrot.slane %v1963, %v1976
        %v1978 = vcombine.low %v1970, %v1977
        %v1980 = vunpack.c.l.s4 1966171168
        %v1981 = vunpack.c.0.s8 %v1980
        %v1982 = vlaneseq
        %v1983 = vshrl.u32 %v1982, 7
        %v1984 = vsub.s32 %v1981, %v1983
        %v1985 = vrot.slane %v1978, %v1984
        %v1987 = vmul.f32 %v1957, %v1985
        %v1988 = vadd.f32 %v1942, %v1987
        %1989 = vrot.lane.b32.xlu0 %v515, 111
        %v1990 = vpop.permute.xlu0 %1989
        %1991 = vrot.lane.b32.xlu0 %v516, 111
        %v1992 = vpop.permute.xlu0 %1991
        %1993 = vrot.lane.b32.xlu0 %v523, 111
        %v1994 = vpop.permute.xlu0 %1993
        %1995 = vrot.lane.b32.xlu0 %v530, 111
        %v1996 = vpop.permute.xlu0 %1995
        %vm1997 = vcmp.lt.s32.totalorder %v333, 111
        %v1998 = vsel %vm1997, %v1994, %v1996
        %v1999 = vsel %vm1997, %v1992, %v1994
        %v2000 = vsel %vm1997, %v1990, %v1992
        %v2001 = vsel %vm1997, %v1996, %v1990
        %s2002 = scalar_lea.vmem [#allocation6], 128
        %v2003 = vld [vmem:[%s2002] ss:$8 sm:$0xf]
        %v2008 = vcombine.low %v2000, %v1999
        %v2009 = vcombine.low %v1998, %v2001
        %v2011 = vunpack.c.l.s4 1966171168
        %v2012 = vunpack.c.0.s8 %v2011
        %v2013 = vlaneseq
        %v2014 = vshrl.u32 %v2013, 7
        %v2015 = vsub.s32 %v2012, %v2014
        %v2016 = vrot.slane %v2008, %v2015
        %v2018 = vunpack.c.l.s4 1966171168
        %v2019 = vunpack.c.0.s8 %v2018
        %v2020 = vlaneseq
        %v2021 = vshrl.u32 %v2020, 7
        %v2022 = vsub.s32 %v2019, %v2021
        %v2023 = vrot.slane %v2009, %v2022
        %v2024 = vcombine.low %v2016, %v2023
        %v2026 = vunpack.c.l.s4 1966171168
        %v2027 = vunpack.c.0.s8 %v2026
        %v2028 = vlaneseq
        %v2029 = vshrl.u32 %v2028, 7
        %v2030 = vsub.s32 %v2027, %v2029
        %v2031 = vrot.slane %v2024, %v2030
        %v2033 = vmul.f32 %v2003, %v2031
        %v2034 = vadd.f32 %v1988, %v2033
        %2035 = vrot.lane.b32.xlu0 %v515, 110
        %v2036 = vpop.permute.xlu0 %2035
        %2037 = vrot.lane.b32.xlu0 %v516, 110
        %v2038 = vpop.permute.xlu0 %2037
        %2039 = vrot.lane.b32.xlu0 %v523, 110
        %v2040 = vpop.permute.xlu0 %2039
        %2041 = vrot.lane.b32.xlu0 %v530, 110
        %v2042 = vpop.permute.xlu0 %2041
        %vm2043 = vcmp.lt.s32.totalorder %v333, 110
        %v2044 = vsel %vm2043, %v2040, %v2042
        %v2045 = vsel %vm2043, %v2038, %v2040
        %v2046 = vsel %vm2043, %v2036, %v2038
        %v2047 = vsel %vm2043, %v2042, %v2036
        %s2048 = scalar_lea.vmem [#allocation6], 129
        %v2049 = vld [vmem:[%s2048] ss:$8 sm:$0xf]
        %v2054 = vcombine.low %v2046, %v2045
        %v2055 = vcombine.low %v2044, %v2047
        %v2057 = vunpack.c.l.s4 1966171168
        %v2058 = vunpack.c.0.s8 %v2057
        %v2059 = vlaneseq
        %v2060 = vshrl.u32 %v2059, 7
        %v2061 = vsub.s32 %v2058, %v2060
        %v2062 = vrot.slane %v2054, %v2061
        %v2064 = vunpack.c.l.s4 1966171168
        %v2065 = vunpack.c.0.s8 %v2064
        %v2066 = vlaneseq
        %v2067 = vshrl.u32 %v2066, 7
        %v2068 = vsub.s32 %v2065, %v2067
        %v2069 = vrot.slane %v2055, %v2068
        %v2070 = vcombine.low %v2062, %v2069
        %v2072 = vunpack.c.l.s4 1966171168
        %v2073 = vunpack.c.0.s8 %v2072
        %v2074 = vlaneseq
        %v2075 = vshrl.u32 %v2074, 7
        %v2076 = vsub.s32 %v2073, %v2075
        %v2077 = vrot.slane %v2070, %v2076
        %v2079 = vmul.f32 %v2049, %v2077
        %v2080 = vadd.f32 %v2034, %v2079
        %2081 = vrot.lane.b32.xlu0 %v515, 109
        %v2082 = vpop.permute.xlu0 %2081
        %2083 = vrot.lane.b32.xlu0 %v516, 109
        %v2084 = vpop.permute.xlu0 %2083
        %2085 = vrot.lane.b32.xlu0 %v523, 109
        %v2086 = vpop.permute.xlu0 %2085
        %2087 = vrot.lane.b32.xlu0 %v530, 109
        %v2088 = vpop.permute.xlu0 %2087
        %vm2089 = vcmp.lt.s32.totalorder %v333, 109
        %v2090 = vsel %vm2089, %v2086, %v2088
        %v2091 = vsel %vm2089, %v2084, %v2086
        %v2092 = vsel %vm2089, %v2082, %v2084
        %v2093 = vsel %vm2089, %v2088, %v2082
        %s2094 = scalar_lea.vmem [#allocation6], 130
        %v2095 = vld [vmem:[%s2094] ss:$8 sm:$0xf]
        %v2100 = vcombine.low %v2092, %v2091
        %v2101 = vcombine.low %v2090, %v2093
        %v2103 = vunpack.c.l.s4 1966171168
        %v2104 = vunpack.c.0.s8 %v2103
        %v2105 = vlaneseq
        %v2106 = vshrl.u32 %v2105, 7
        %v2107 = vsub.s32 %v2104, %v2106
        %v2108 = vrot.slane %v2100, %v2107
        %v2110 = vunpack.c.l.s4 1966171168
        %v2111 = vunpack.c.0.s8 %v2110
        %v2112 = vlaneseq
        %v2113 = vshrl.u32 %v2112, 7
        %v2114 = vsub.s32 %v2111, %v2113
        %v2115 = vrot.slane %v2101, %v2114
        %v2116 = vcombine.low %v2108, %v2115
        %v2118 = vunpack.c.l.s4 1966171168
        %v2119 = vunpack.c.0.s8 %v2118
        %v2120 = vlaneseq
        %v2121 = vshrl.u32 %v2120, 7
        %v2122 = vsub.s32 %v2119, %v2121
        %v2123 = vrot.slane %v2116, %v2122
        %v2125 = vmul.f32 %v2095, %v2123
        %v2126 = vadd.f32 %v2080, %v2125
        %2127 = vrot.lane.b32.xlu0 %v515, 99
        %v2128 = vpop.permute.xlu0 %2127
        %2129 = vrot.lane.b32.xlu0 %v516, 99
        %v2130 = vpop.permute.xlu0 %2129
        %2131 = vrot.lane.b32.xlu0 %v523, 99
        %v2132 = vpop.permute.xlu0 %2131
        %2133 = vrot.lane.b32.xlu0 %v530, 99
        %v2134 = vpop.permute.xlu0 %2133
        %vm2135 = vcmp.lt.s32.totalorder %v333, 99
        %v2136 = vsel %vm2135, %v2132, %v2134
        %v2137 = vsel %vm2135, %v2130, %v2132
        %v2138 = vsel %vm2135, %v2128, %v2130
        %v2139 = vsel %vm2135, %v2134, %v2128
        %s2140 = scalar_lea.vmem [#allocation6], 131
        %v2141 = vld [vmem:[%s2140] ss:$8 sm:$0xf]
        %v2146 = vcombine.low %v2138, %v2137
        %v2147 = vcombine.low %v2136, %v2139
        %v2149 = vunpack.c.l.s4 1966171168
        %v2150 = vunpack.c.0.s8 %v2149
        %v2151 = vlaneseq
        %v2152 = vshrl.u32 %v2151, 7
        %v2153 = vsub.s32 %v2150, %v2152
        %v2154 = vrot.slane %v2146, %v2153
        %v2156 = vunpack.c.l.s4 1966171168
        %v2157 = vunpack.c.0.s8 %v2156
        %v2158 = vlaneseq
        %v2159 = vshrl.u32 %v2158, 7
        %v2160 = vsub.s32 %v2157, %v2159
        %v2161 = vrot.slane %v2147, %v2160
        %v2162 = vcombine.low %v2154, %v2161
        %v2164 = vunpack.c.l.s4 1966171168
        %v2165 = vunpack.c.0.s8 %v2164
        %v2166 = vlaneseq
        %v2167 = vshrl.u32 %v2166, 7
        %v2168 = vsub.s32 %v2165, %v2167
        %v2169 = vrot.slane %v2162, %v2168
        %v2171 = vmul.f32 %v2141, %v2169
        %v2172 = vadd.f32 %v2126, %v2171
        %2173 = vrot.lane.b32.xlu0 %v515, 98
        %v2174 = vpop.permute.xlu0 %2173
        %2175 = vrot.lane.b32.xlu0 %v516, 98
        %v2176 = vpop.permute.xlu0 %2175
        %2177 = vrot.lane.b32.xlu0 %v523, 98
        %v2178 = vpop.permute.xlu0 %2177
        %2179 = vrot.lane.b32.xlu0 %v530, 98
        %v2180 = vpop.permute.xlu0 %2179
        %vm2181 = vcmp.lt.s32.totalorder %v333, 98
        %v2182 = vsel %vm2181, %v2178, %v2180
        %v2183 = vsel %vm2181, %v2176, %v2178
        %v2184 = vsel %vm2181, %v2174, %v2176
        %v2185 = vsel %vm2181, %v2180, %v2174
        %s2186 = scalar_lea.vmem [#allocation6], 132
        %v2187 = vld [vmem:[%s2186] ss:$8 sm:$0xf]
        %v2192 = vcombine.low %v2184, %v2183
        %v2193 = vcombine.low %v2182, %v2185
        %v2195 = vunpack.c.l.s4 1966171168
        %v2196 = vunpack.c.0.s8 %v2195
        %v2197 = vlaneseq
        %v2198 = vshrl.u32 %v2197, 7
        %v2199 = vsub.s32 %v2196, %v2198
        %v2200 = vrot.slane %v2192, %v2199
        %v2202 = vunpack.c.l.s4 1966171168
        %v2203 = vunpack.c.0.s8 %v2202
        %v2204 = vlaneseq
        %v2205 = vshrl.u32 %v2204, 7
        %v2206 = vsub.s32 %v2203, %v2205
        %v2207 = vrot.slane %v2193, %v2206
        %v2208 = vcombine.low %v2200, %v2207
        %v2210 = vunpack.c.l.s4 1966171168
        %v2211 = vunpack.c.0.s8 %v2210
        %v2212 = vlaneseq
        %v2213 = vshrl.u32 %v2212, 7
        %v2214 = vsub.s32 %v2211, %v2213
        %v2215 = vrot.slane %v2208, %v2214
        %v2217 = vmul.f32 %v2187, %v2215
        %v2218 = vadd.f32 %v2172, %v2217
        %2219 = vrot.lane.b32.xlu0 %v515, 97
        %v2220 = vpop.permute.xlu0 %2219
        %2221 = vrot.lane.b32.xlu0 %v516, 97
        %v2222 = vpop.permute.xlu0 %2221
        %2223 = vrot.lane.b32.xlu0 %v523, 97
        %v2224 = vpop.permute.xlu0 %2223
        %2225 = vrot.lane.b32.xlu0 %v530, 97
        %v2226 = vpop.permute.xlu0 %2225
        %vm2227 = vcmp.lt.s32.totalorder %v333, 97
        %v2228 = vsel %vm2227, %v2224, %v2226
        %v2229 = vsel %vm2227, %v2222, %v2224
        %v2230 = vsel %vm2227, %v2220, %v2222
        %v2231 = vsel %vm2227, %v2226, %v2220
        %s2232 = scalar_lea.vmem [#allocation6], 133
        %v2233 = vld [vmem:[%s2232] ss:$8 sm:$0xf]
        %v2238 = vcombine.low %v2230, %v2229
        %v2239 = vcombine.low %v2228, %v2231
        %v2241 = vunpack.c.l.s4 1966171168
        %v2242 = vunpack.c.0.s8 %v2241
        %v2243 = vlaneseq
        %v2244 = vshrl.u32 %v2243, 7
        %v2245 = vsub.s32 %v2242, %v2244
        %v2246 = vrot.slane %v2238, %v2245
        %v2248 = vunpack.c.l.s4 1966171168
        %v2249 = vunpack.c.0.s8 %v2248
        %v2250 = vlaneseq
        %v2251 = vshrl.u32 %v2250, 7
        %v2252 = vsub.s32 %v2249, %v2251
        %v2253 = vrot.slane %v2239, %v2252
        %v2254 = vcombine.low %v2246, %v2253
        %v2256 = vunpack.c.l.s4 1966171168
        %v2257 = vunpack.c.0.s8 %v2256
        %v2258 = vlaneseq
        %v2259 = vshrl.u32 %v2258, 7
        %v2260 = vsub.s32 %v2257, %v2259
        %v2261 = vrot.slane %v2254, %v2260
        %v2263 = vmul.f32 %v2233, %v2261
        %v2264 = vadd.f32 %v2218, %v2263
        %2265 = vrot.lane.b32.xlu0 %v515, 96
        %v2266 = vpop.permute.xlu0 %2265
        %2267 = vrot.lane.b32.xlu0 %v516, 96
        %v2268 = vpop.permute.xlu0 %2267
        %2269 = vrot.lane.b32.xlu0 %v523, 96
        %v2270 = vpop.permute.xlu0 %2269
        %2271 = vrot.lane.b32.xlu0 %v530, 96
        %v2272 = vpop.permute.xlu0 %2271
        %vm2273 = vcmp.lt.s32.totalorder %v333, 96
        %v2274 = vsel %vm2273, %v2270, %v2272
        %v2275 = vsel %vm2273, %v2268, %v2270
        %v2276 = vsel %vm2273, %v2266, %v2268
        %v2277 = vsel %vm2273, %v2272, %v2266
        %s2278 = scalar_lea.vmem [#allocation6], 134
        %v2279 = vld [vmem:[%s2278] ss:$8 sm:$0xf]
        %v2284 = vcombine.low %v2276, %v2275
        %v2285 = vcombine.low %v2274, %v2277
        %v2287 = vunpack.c.l.s4 1966171168
        %v2288 = vunpack.c.0.s8 %v2287
        %v2289 = vlaneseq
        %v2290 = vshrl.u32 %v2289, 7
        %v2291 = vsub.s32 %v2288, %v2290
        %v2292 = vrot.slane %v2284, %v2291
        %v2294 = vunpack.c.l.s4 1966171168
        %v2295 = vunpack.c.0.s8 %v2294
        %v2296 = vlaneseq
        %v2297 = vshrl.u32 %v2296, 7
        %v2298 = vsub.s32 %v2295, %v2297
        %v2299 = vrot.slane %v2285, %v2298
        %v2300 = vcombine.low %v2292, %v2299
        %v2302 = vunpack.c.l.s4 1966171168
        %v2303 = vunpack.c.0.s8 %v2302
        %v2304 = vlaneseq
        %v2305 = vshrl.u32 %v2304, 7
        %v2306 = vsub.s32 %v2303, %v2305
        %v2307 = vrot.slane %v2300, %v2306
        %v2309 = vmul.f32 %v2279, %v2307
        %v2310 = vadd.f32 %v2264, %v2309
        %2311 = vrot.lane.b32.xlu0 %v515, 95
        %v2312 = vpop.permute.xlu0 %2311
        %2313 = vrot.lane.b32.xlu0 %v516, 95
        %v2314 = vpop.permute.xlu0 %2313
        %2315 = vrot.lane.b32.xlu0 %v523, 95
        %v2316 = vpop.permute.xlu0 %2315
        %2317 = vrot.lane.b32.xlu0 %v530, 95
        %v2318 = vpop.permute.xlu0 %2317
        %vm2319 = vcmp.lt.s32.totalorder %v333, 95
        %v2320 = vsel %vm2319, %v2316, %v2318
        %v2321 = vsel %vm2319, %v2314, %v2316
        %v2322 = vsel %vm2319, %v2312, %v2314
        %v2323 = vsel %vm2319, %v2318, %v2312
        %s2324 = scalar_lea.vmem [#allocation6], 135
        %v2325 = vld [vmem:[%s2324] ss:$8 sm:$0xf]
        %v2330 = vcombine.low %v2322, %v2321
        %v2331 = vcombine.low %v2320, %v2323
        %v2333 = vunpack.c.l.s4 1966171168
        %v2334 = vunpack.c.0.s8 %v2333
        %v2335 = vlaneseq
        %v2336 = vshrl.u32 %v2335, 7
        %v2337 = vsub.s32 %v2334, %v2336
        %v2338 = vrot.slane %v2330, %v2337
        %v2340 = vunpack.c.l.s4 1966171168
        %v2341 = vunpack.c.0.s8 %v2340
        %v2342 = vlaneseq
        %v2343 = vshrl.u32 %v2342, 7
        %v2344 = vsub.s32 %v2341, %v2343
        %v2345 = vrot.slane %v2331, %v2344
        %v2346 = vcombine.low %v2338, %v2345
        %v2348 = vunpack.c.l.s4 1966171168
        %v2349 = vunpack.c.0.s8 %v2348
        %v2350 = vlaneseq
        %v2351 = vshrl.u32 %v2350, 7
        %v2352 = vsub.s32 %v2349, %v2351
        %v2353 = vrot.slane %v2346, %v2352
        %v2355 = vmul.f32 %v2325, %v2353
        %v2356 = vadd.f32 %v2310, %v2355
        %2357 = vrot.lane.b32.xlu0 %v515, 94
        %v2358 = vpop.permute.xlu0 %2357
        %2359 = vrot.lane.b32.xlu0 %v516, 94
        %v2360 = vpop.permute.xlu0 %2359
        %2361 = vrot.lane.b32.xlu0 %v523, 94
        %v2362 = vpop.permute.xlu0 %2361
        %2363 = vrot.lane.b32.xlu0 %v530, 94
        %v2364 = vpop.permute.xlu0 %2363
        %vm2365 = vcmp.lt.s32.totalorder %v333, 94
        %v2366 = vsel %vm2365, %v2362, %v2364
        %v2367 = vsel %vm2365, %v2360, %v2362
        %v2368 = vsel %vm2365, %v2358, %v2360
        %v2369 = vsel %vm2365, %v2364, %v2358
        %s2370 = scalar_lea.vmem [#allocation6], 160
        %v2371 = vld [vmem:[%s2370] ss:$8 sm:$0xf]
        %v2376 = vcombine.low %v2368, %v2367
        %v2377 = vcombine.low %v2366, %v2369
        %v2379 = vunpack.c.l.s4 1966171168
        %v2380 = vunpack.c.0.s8 %v2379
        %v2381 = vlaneseq
        %v2382 = vshrl.u32 %v2381, 7
        %v2383 = vsub.s32 %v2380, %v2382
        %v2384 = vrot.slane %v2376, %v2383
        %v2386 = vunpack.c.l.s4 1966171168
        %v2387 = vunpack.c.0.s8 %v2386
        %v2388 = vlaneseq
        %v2389 = vshrl.u32 %v2388, 7
        %v2390 = vsub.s32 %v2387, %v2389
        %v2391 = vrot.slane %v2377, %v2390
        %v2392 = vcombine.low %v2384, %v2391
        %v2394 = vunpack.c.l.s4 1966171168
        %v2395 = vunpack.c.0.s8 %v2394
        %v2396 = vlaneseq
        %v2397 = vshrl.u32 %v2396, 7
        %v2398 = vsub.s32 %v2395, %v2397
        %v2399 = vrot.slane %v2392, %v2398
        %v2401 = vmul.f32 %v2371, %v2399
        %v2402 = vadd.f32 %v2356, %v2401
        %2403 = vrot.lane.b32.xlu0 %v515, 93
        %v2404 = vpop.permute.xlu0 %2403
        %2405 = vrot.lane.b32.xlu0 %v516, 93
        %v2406 = vpop.permute.xlu0 %2405
        %2407 = vrot.lane.b32.xlu0 %v523, 93
        %v2408 = vpop.permute.xlu0 %2407
        %2409 = vrot.lane.b32.xlu0 %v530, 93
        %v2410 = vpop.permute.xlu0 %2409
        %vm2411 = vcmp.lt.s32.totalorder %v333, 93
        %v2412 = vsel %vm2411, %v2408, %v2410
        %v2413 = vsel %vm2411, %v2406, %v2408
        %v2414 = vsel %vm2411, %v2404, %v2406
        %v2415 = vsel %vm2411, %v2410, %v2404
        %s2416 = scalar_lea.vmem [#allocation6], 161
        %v2417 = vld [vmem:[%s2416] ss:$8 sm:$0xf]
        %v2422 = vcombine.low %v2414, %v2413
        %v2423 = vcombine.low %v2412, %v2415
        %v2425 = vunpack.c.l.s4 1966171168
        %v2426 = vunpack.c.0.s8 %v2425
        %v2427 = vlaneseq
        %v2428 = vshrl.u32 %v2427, 7
        %v2429 = vsub.s32 %v2426, %v2428
        %v2430 = vrot.slane %v2422, %v2429
        %v2432 = vunpack.c.l.s4 1966171168
        %v2433 = vunpack.c.0.s8 %v2432
        %v2434 = vlaneseq
        %v2435 = vshrl.u32 %v2434, 7
        %v2436 = vsub.s32 %v2433, %v2435
        %v2437 = vrot.slane %v2423, %v2436
        %v2438 = vcombine.low %v2430, %v2437
        %v2440 = vunpack.c.l.s4 1966171168
        %v2441 = vunpack.c.0.s8 %v2440
        %v2442 = vlaneseq
        %v2443 = vshrl.u32 %v2442, 7
        %v2444 = vsub.s32 %v2441, %v2443
        %v2445 = vrot.slane %v2438, %v2444
        %v2447 = vmul.f32 %v2417, %v2445
        %v2448 = vadd.f32 %v2402, %v2447
        %2449 = vrot.lane.b32.xlu0 %v515, 83
        %v2450 = vpop.permute.xlu0 %2449
        %2451 = vrot.lane.b32.xlu0 %v516, 83
        %v2452 = vpop.permute.xlu0 %2451
        %2453 = vrot.lane.b32.xlu0 %v523, 83
        %v2454 = vpop.permute.xlu0 %2453
        %2455 = vrot.lane.b32.xlu0 %v530, 83
        %v2456 = vpop.permute.xlu0 %2455
        %vm2457 = vcmp.lt.s32.totalorder %v333, 83
        %v2458 = vsel %vm2457, %v2454, %v2456
        %v2459 = vsel %vm2457, %v2452, %v2454
        %v2460 = vsel %vm2457, %v2450, %v2452
        %v2461 = vsel %vm2457, %v2456, %v2450
        %s2462 = scalar_lea.vmem [#allocation6], 162
        %v2463 = vld [vmem:[%s2462] ss:$8 sm:$0xf]
        %v2468 = vcombine.low %v2460, %v2459
        %v2469 = vcombine.low %v2458, %v2461
        %v2471 = vunpack.c.l.s4 1966171168
        %v2472 = vunpack.c.0.s8 %v2471
        %v2473 = vlaneseq
        %v2474 = vshrl.u32 %v2473, 7
        %v2475 = vsub.s32 %v2472, %v2474
        %v2476 = vrot.slane %v2468, %v2475
        %v2478 = vunpack.c.l.s4 1966171168
        %v2479 = vunpack.c.0.s8 %v2478
        %v2480 = vlaneseq
        %v2481 = vshrl.u32 %v2480, 7
        %v2482 = vsub.s32 %v2479, %v2481
        %v2483 = vrot.slane %v2469, %v2482
        %v2484 = vcombine.low %v2476, %v2483
        %v2486 = vunpack.c.l.s4 1966171168
        %v2487 = vunpack.c.0.s8 %v2486
        %v2488 = vlaneseq
        %v2489 = vshrl.u32 %v2488, 7
        %v2490 = vsub.s32 %v2487, %v2489
        %v2491 = vrot.slane %v2484, %v2490
        %v2493 = vmul.f32 %v2463, %v2491
        %v2494 = vadd.f32 %v2448, %v2493
        %2495 = vrot.lane.b32.xlu0 %v515, 82
        %v2496 = vpop.permute.xlu0 %2495
        %2497 = vrot.lane.b32.xlu0 %v516, 82
        %v2498 = vpop.permute.xlu0 %2497
        %2499 = vrot.lane.b32.xlu0 %v523, 82
        %v2500 = vpop.permute.xlu0 %2499
        %2501 = vrot.lane.b32.xlu0 %v530, 82
        %v2502 = vpop.permute.xlu0 %2501
        %vm2503 = vcmp.lt.s32.totalorder %v333, 82
        %v2504 = vsel %vm2503, %v2500, %v2502
        %v2505 = vsel %vm2503, %v2498, %v2500
        %v2506 = vsel %vm2503, %v2496, %v2498
        %v2507 = vsel %vm2503, %v2502, %v2496
        %s2508 = scalar_lea.vmem [#allocation6], 163
        %v2509 = vld [vmem:[%s2508] ss:$8 sm:$0xf]
        %v2514 = vcombine.low %v2506, %v2505
        %v2515 = vcombine.low %v2504, %v2507
        %v2517 = vunpack.c.l.s4 1966171168
        %v2518 = vunpack.c.0.s8 %v2517
        %v2519 = vlaneseq
        %v2520 = vshrl.u32 %v2519, 7
        %v2521 = vsub.s32 %v2518, %v2520
        %v2522 = vrot.slane %v2514, %v2521
        %v2524 = vunpack.c.l.s4 1966171168
        %v2525 = vunpack.c.0.s8 %v2524
        %v2526 = vlaneseq
        %v2527 = vshrl.u32 %v2526, 7
        %v2528 = vsub.s32 %v2525, %v2527
        %v2529 = vrot.slane %v2515, %v2528
        %v2530 = vcombine.low %v2522, %v2529
        %v2532 = vunpack.c.l.s4 1966171168
        %v2533 = vunpack.c.0.s8 %v2532
        %v2534 = vlaneseq
        %v2535 = vshrl.u32 %v2534, 7
        %v2536 = vsub.s32 %v2533, %v2535
        %v2537 = vrot.slane %v2530, %v2536
        %v2539 = vmul.f32 %v2509, %v2537
        %v2540 = vadd.f32 %v2494, %v2539
        %2541 = vrot.lane.b32.xlu0 %v515, 81
        %v2542 = vpop.permute.xlu0 %2541
        %2543 = vrot.lane.b32.xlu0 %v516, 81
        %v2544 = vpop.permute.xlu0 %2543
        %2545 = vrot.lane.b32.xlu0 %v523, 81
        %v2546 = vpop.permute.xlu0 %2545
        %2547 = vrot.lane.b32.xlu0 %v530, 81
        %v2548 = vpop.permute.xlu0 %2547
        %vm2549 = vcmp.lt.s32.totalorder %v333, 81
        %v2550 = vsel %vm2549, %v2546, %v2548
        %v2551 = vsel %vm2549, %v2544, %v2546
        %v2552 = vsel %vm2549, %v2542, %v2544
        %v2553 = vsel %vm2549, %v2548, %v2542
        %s2554 = scalar_lea.vmem [#allocation6], 164
        %v2555 = vld [vmem:[%s2554] ss:$8 sm:$0xf]
        %v2560 = vcombine.low %v2552, %v2551
        %v2561 = vcombine.low %v2550, %v2553
        %v2563 = vunpack.c.l.s4 1966171168
        %v2564 = vunpack.c.0.s8 %v2563
        %v2565 = vlaneseq
        %v2566 = vshrl.u32 %v2565, 7
        %v2567 = vsub.s32 %v2564, %v2566
        %v2568 = vrot.slane %v2560, %v2567
        %v2570 = vunpack.c.l.s4 1966171168
        %v2571 = vunpack.c.0.s8 %v2570
        %v2572 = vlaneseq
        %v2573 = vshrl.u32 %v2572, 7
        %v2574 = vsub.s32 %v2571, %v2573
        %v2575 = vrot.slane %v2561, %v2574
        %v2576 = vcombine.low %v2568, %v2575
        %v2578 = vunpack.c.l.s4 1966171168
        %v2579 = vunpack.c.0.s8 %v2578
        %v2580 = vlaneseq
        %v2581 = vshrl.u32 %v2580, 7
        %v2582 = vsub.s32 %v2579, %v2581
        %v2583 = vrot.slane %v2576, %v2582
        %v2585 = vmul.f32 %v2555, %v2583
        %v2586 = vadd.f32 %v2540, %v2585
        %2587 = vrot.lane.b32.xlu0 %v515, 80
        %v2588 = vpop.permute.xlu0 %2587
        %2589 = vrot.lane.b32.xlu0 %v516, 80
        %v2590 = vpop.permute.xlu0 %2589
        %2591 = vrot.lane.b32.xlu0 %v523, 80
        %v2592 = vpop.permute.xlu0 %2591
        %2593 = vrot.lane.b32.xlu0 %v530, 80
        %v2594 = vpop.permute.xlu0 %2593
        %vm2595 = vcmp.lt.s32.totalorder %v333, 80
        %v2596 = vsel %vm2595, %v2592, %v2594
        %v2597 = vsel %vm2595, %v2590, %v2592
        %v2598 = vsel %vm2595, %v2588, %v2590
        %v2599 = vsel %vm2595, %v2594, %v2588
        %s2600 = scalar_lea.vmem [#allocation6], 165
        %v2601 = vld [vmem:[%s2600] ss:$8 sm:$0xf]
        %v2606 = vcombine.low %v2598, %v2597
        %v2607 = vcombine.low %v2596, %v2599
        %v2609 = vunpack.c.l.s4 1966171168
        %v2610 = vunpack.c.0.s8 %v2609
        %v2611 = vlaneseq
        %v2612 = vshrl.u32 %v2611, 7
        %v2613 = vsub.s32 %v2610, %v2612
        %v2614 = vrot.slane %v2606, %v2613
        %v2616 = vunpack.c.l.s4 1966171168
        %v2617 = vunpack.c.0.s8 %v2616
        %v2618 = vlaneseq
        %v2619 = vshrl.u32 %v2618, 7
        %v2620 = vsub.s32 %v2617, %v2619
        %v2621 = vrot.slane %v2607, %v2620
        %v2622 = vcombine.low %v2614, %v2621
        %v2624 = vunpack.c.l.s4 1966171168
        %v2625 = vunpack.c.0.s8 %v2624
        %v2626 = vlaneseq
        %v2627 = vshrl.u32 %v2626, 7
        %v2628 = vsub.s32 %v2625, %v2627
        %v2629 = vrot.slane %v2622, %v2628
        %v2631 = vmul.f32 %v2601, %v2629
        %v2632 = vadd.f32 %v2586, %v2631
        %2633 = vrot.lane.b32.xlu0 %v515, 79
        %v2634 = vpop.permute.xlu0 %2633
        %2635 = vrot.lane.b32.xlu0 %v516, 79
        %v2636 = vpop.permute.xlu0 %2635
        %2637 = vrot.lane.b32.xlu0 %v523, 79
        %v2638 = vpop.permute.xlu0 %2637
        %2639 = vrot.lane.b32.xlu0 %v530, 79
        %v2640 = vpop.permute.xlu0 %2639
        %vm2641 = vcmp.lt.s32.totalorder %v333, 79
        %v2642 = vsel %vm2641, %v2638, %v2640
        %v2643 = vsel %vm2641, %v2636, %v2638
        %v2644 = vsel %vm2641, %v2634, %v2636
        %v2645 = vsel %vm2641, %v2640, %v2634
        %s2646 = scalar_lea.vmem [#allocation6], 166
        %v2647 = vld [vmem:[%s2646] ss:$8 sm:$0xf]
        %v2652 = vcombine.low %v2644, %v2643
        %v2653 = vcombine.low %v2642, %v2645
        %v2655 = vunpack.c.l.s4 1966171168
        %v2656 = vunpack.c.0.s8 %v2655
        %v2657 = vlaneseq
        %v2658 = vshrl.u32 %v2657, 7
        %v2659 = vsub.s32 %v2656, %v2658
        %v2660 = vrot.slane %v2652, %v2659
        %v2662 = vunpack.c.l.s4 1966171168
        %v2663 = vunpack.c.0.s8 %v2662
        %v2664 = vlaneseq
        %v2665 = vshrl.u32 %v2664, 7
        %v2666 = vsub.s32 %v2663, %v2665
        %v2667 = vrot.slane %v2653, %v2666
        %v2668 = vcombine.low %v2660, %v2667
        %v2670 = vunpack.c.l.s4 1966171168
        %v2671 = vunpack.c.0.s8 %v2670
        %v2672 = vlaneseq
        %v2673 = vshrl.u32 %v2672, 7
        %v2674 = vsub.s32 %v2671, %v2673
        %v2675 = vrot.slane %v2668, %v2674
        %v2677 = vmul.f32 %v2647, %v2675
        %v2678 = vadd.f32 %v2632, %v2677
        %2679 = vrot.lane.b32.xlu0 %v515, 78
        %v2680 = vpop.permute.xlu0 %2679
        %2681 = vrot.lane.b32.xlu0 %v516, 78
        %v2682 = vpop.permute.xlu0 %2681
        %2683 = vrot.lane.b32.xlu0 %v523, 78
        %v2684 = vpop.permute.xlu0 %2683
        %2685 = vrot.lane.b32.xlu0 %v530, 78
        %v2686 = vpop.permute.xlu0 %2685
        %vm2687 = vcmp.lt.s32.totalorder %v333, 78
        %v2688 = vsel %vm2687, %v2684, %v2686
        %v2689 = vsel %vm2687, %v2682, %v2684
        %v2690 = vsel %vm2687, %v2680, %v2682
        %v2691 = vsel %vm2687, %v2686, %v2680
        %s2692 = scalar_lea.vmem [#allocation6], 167
        %v2693 = vld [vmem:[%s2692] ss:$8 sm:$0xf]
        %v2698 = vcombine.low %v2690, %v2689
        %v2699 = vcombine.low %v2688, %v2691
        %v2701 = vunpack.c.l.s4 1966171168
        %v2702 = vunpack.c.0.s8 %v2701
        %v2703 = vlaneseq
        %v2704 = vshrl.u32 %v2703, 7
        %v2705 = vsub.s32 %v2702, %v2704
        %v2706 = vrot.slane %v2698, %v2705
        %v2708 = vunpack.c.l.s4 1966171168
        %v2709 = vunpack.c.0.s8 %v2708
        %v2710 = vlaneseq
        %v2711 = vshrl.u32 %v2710, 7
        %v2712 = vsub.s32 %v2709, %v2711
        %v2713 = vrot.slane %v2699, %v2712
        %v2714 = vcombine.low %v2706, %v2713
        %v2716 = vunpack.c.l.s4 1966171168
        %v2717 = vunpack.c.0.s8 %v2716
        %v2718 = vlaneseq
        %v2719 = vshrl.u32 %v2718, 7
        %v2720 = vsub.s32 %v2717, %v2719
        %v2721 = vrot.slane %v2714, %v2720
        %v2723 = vmul.f32 %v2693, %v2721
        %v2724 = vadd.f32 %v2678, %v2723
        %2725 = vrot.lane.b32.xlu0 %v515, 77
        %v2726 = vpop.permute.xlu0 %2725
        %2727 = vrot.lane.b32.xlu0 %v516, 77
        %v2728 = vpop.permute.xlu0 %2727
        %2729 = vrot.lane.b32.xlu0 %v523, 77
        %v2730 = vpop.permute.xlu0 %2729
        %2731 = vrot.lane.b32.xlu0 %v530, 77
        %v2732 = vpop.permute.xlu0 %2731
        %vm2733 = vcmp.lt.s32.totalorder %v333, 77
        %v2734 = vsel %vm2733, %v2730, %v2732
        %v2735 = vsel %vm2733, %v2728, %v2730
        %v2736 = vsel %vm2733, %v2726, %v2728
        %v2737 = vsel %vm2733, %v2732, %v2726
        %s2738 = scalar_lea.vmem [#allocation6], 192
        %v2739 = vld [vmem:[%s2738] ss:$8 sm:$0xf]
        %v2744 = vcombine.low %v2736, %v2735
        %v2745 = vcombine.low %v2734, %v2737
        %v2747 = vunpack.c.l.s4 1966171168
        %v2748 = vunpack.c.0.s8 %v2747
        %v2749 = vlaneseq
        %v2750 = vshrl.u32 %v2749, 7
        %v2751 = vsub.s32 %v2748, %v2750
        %v2752 = vrot.slane %v2744, %v2751
        %v2754 = vunpack.c.l.s4 1966171168
        %v2755 = vunpack.c.0.s8 %v2754
        %v2756 = vlaneseq
        %v2757 = vshrl.u32 %v2756, 7
        %v2758 = vsub.s32 %v2755, %v2757
        %v2759 = vrot.slane %v2745, %v2758
        %v2760 = vcombine.low %v2752, %v2759
        %v2762 = vunpack.c.l.s4 1966171168
        %v2763 = vunpack.c.0.s8 %v2762
        %v2764 = vlaneseq
        %v2765 = vshrl.u32 %v2764, 7
        %v2766 = vsub.s32 %v2763, %v2765
        %v2767 = vrot.slane %v2760, %v2766
        %v2769 = vmul.f32 %v2739, %v2767
        %v2770 = vadd.f32 %v2724, %v2769
        %v2772 = vrot.slane %v2770, 2
        %v2774 = vadd.f32 %v2770, %v2772
        %s2775 = sld [smem:[#allocation2]]
        %v2776 = vstv %s2775
        %v2777 = vadd.f32 %v2774, %v2776
        %v2778 = vxor.u32 %v2777, 2147483648
        %v2779 = vmul.f32 %v2778, 1.442695
        %v2780 = vpow.pop %v2779
        %v2781 = vadd.f32 %v2780, 1.0
        %v2782 = vrcp.pop %v2781
        %v2783 = vmul.f32 1.0, %v2782
        %v2785 = vlaneseq
        %v2786 = vshrl.u32 %v2785, 7
        %v2787 = vsub.s32 0, %v2786
        %v2788 = vrot.slane %v2783, %v2787
        %v2789 = vlaneseq
        %v2790 = vshrl.u32 %v2789, 7
        %v2791 = vsub.s32 1, %v2790
        %v2792 = vrot.slane %v2783, %v2791
        %v2795 = vmul.f32 %v496, %v2788
        %v2796 = vmul.f32 %v497, %v2792
        %v2797 = vmul.f32 %v498, %v2788
        %v2798 = vmul.f32 %v499, %v2792
        %2799 = vst [vmem:[%s312] sm:$0xff] %v2795
        %2800 = vst [vmem:[%s312 + $0x8] sm:$0xff] %v2796
        %2801 = vst [vmem:[%s312 + $0x10] sm:$0xff] %v2797
        %2802 = vst [vmem:[%s312 + $0x18] sm:$0xff] %v2798
        %s2803 = sand.u32 %s186, 1
        %s2804 = scalar_lea.sflag [#allocation5], %s2803
        %s2805 = sand.u32 %s186, 1
        %s2806 = smul.addr %s2805, 32
        %s2807 = scalar_lea.vmem [#allocation8], %s2806
        // Predicated region
        $region57: #{tpu_custom_call.1} parent=47 // pred_check
          %p2808 = pneg %p196
        $region58: #{tpu_custom_call.1} parent=47 // pred_check_branch
          %2810 = sbr.rel (%p2808) target = $region60
        $region59: #{tpu_custom_call.1} parent=47 // pred_region
          %s2812 = ssub.s32 512, 512
          %2813 = vsyncadd %s2804, %s2812
          %s2814 = smul.addr %s26, 4
          %s2815 = smul.addr %s2814, 128
          %s2816 = scalar_lea.hbm %s7, %s2815
          %s2817 = sshll.u32 %s2807, 4
          %s2818 = int_to_ptr.vmem [resolvable:$true] %s2817
          %2823 = dma.vmem_to_hbm [thread:$0]  %s2818, 512, %s2816, %s2804, 256, 256, 16
        $region60: #{tpu_custom_call.1} parent=47 // pred_fallthru
          _
      $region48: #{tpu_custom_call.1} parent=5 // pred_fallthru
        _
      %p2824 = scmp.le.s32.totalorder 2, %s21
      // Predicated region
      $region61: #{tpu_custom_call.1} parent=5 // pred_check
        %p2825 = pneg %p2824
      $region62: #{tpu_custom_call.1} parent=5 // pred_check_branch
        %2827 = sbr.rel (%p2825) target = $region64
      $region63: #{tpu_custom_call.1} parent=5 // pred_region
        %s2828 = ssub.s32 %s21, 2
        // Predicated region
        $region65: #{tpu_custom_call.1} parent=63 // pred_check
          %p2829 = pneg %p202
        $region66: #{tpu_custom_call.1} parent=63 // pred_check_branch
          %2831 = sbr.rel (%p2829) target = $region68
        $region67: #{tpu_custom_call.1} parent=63 // pred_region
          %s2832 = sand.u32 %s187, 1
          %s2833 = scalar_lea.sflag [#allocation5], %s2832
          %s2834 = sand.u32 %s187, 1
          %s2835 = smul.addr %s2834, 32
          %s2836 = scalar_lea.vmem [#allocation8], %s2835
          %2837 = dma.done %s2833, 512
        $region68: #{tpu_custom_call.1} parent=63 // pred_fallthru
          _
      $region64: #{tpu_custom_call.1} parent=5 // pred_fallthru
        _
    $region6: #{tpu_custom_call.1} parent=1 // loop_footer
      %s25 = sadd.s32 1, %s21
    $region7: #{tpu_custom_call.1} parent=1 // loop_footer_branch
      %20 = sbr.rel target = $region3
    $region8: #{tpu_custom_call.1} parent=1 // loop_exit
      _
    %2838 = vsyncpa [#allocation4], 1
    %s2839 = scalar_lea.sflag [#allocation4], 1
    %2840 = vsyncpa %s2839, 1
    %2841 = vsyncpa [#allocation7], 1
    %2842 = vsyncpa [#allocation5], 1
    %s2843 = scalar_lea.sflag [#allocation5], 1
    %2844 = vsyncpa %s2843, 1

</llo_original>
